<compile_context>
chip_gen: v7x
topology: tpu7x:2x2x1
jax: 0.10.0
libtpu: 0.0.40
codegen_flags: <defaults>
</compile_context>

<pallas_src>
import jax
import jax.numpy as jnp
from jax.experimental import pallas as pl
from jax.experimental.pallas import tpu as pltpu


def fused_head_kernel(pooled_ref, pool_w_ref, pool_b_ref,
                      w1_ref, b1_ref, w2p_ref, b2_ref, o_ref):
    # --- pooler (fused from the encoder stub): cls_hs = tanh(pooled @ Wp + bp)
    p = jnp.dot(pooled_ref[...], pool_w_ref[...],
                preferred_element_type=jnp.float32)          # [TB, 768] f32
    cls_hs = jnp.tanh(p + pool_b_ref[...])

    # --- fc1 (768 -> 128) + ReLU
    h = jnp.dot(cls_hs.astype(w1_ref.dtype), w1_ref[...],
                preferred_element_type=jnp.float32)          # [TB, 128] f32
    h = jnp.maximum(h + b1_ref[...], 0.0)

    # Dropout(0.1): identity at inference (PyTorch eval-mode semantics).

    # --- fc2, padded to 128 output lanes (only lane 0 is real) + Sigmoid
    y = jnp.dot(h.astype(w2p_ref.dtype), w2p_ref[...],
                preferred_element_type=jnp.float32)          # [TB, 128] f32
    y = y + b2_ref[0, 0]                                     # scalar from SMEM
    o_ref[...] = jax.nn.sigmoid(y).astype(o_ref.dtype)       # lane-dense store


def _round_up(x, m):
    return (x + m - 1) // m * m


def lm_arch_forward(pooled, pool_w, pool_b, w1, b1, w2, b2, *, tb_max=512):
    """pooled: [B, 768] masked-mean encoder output; returns sigmoid probs [B, 1]."""
    B, H = pooled.shape           # H = 768
    H1 = w1.shape[1]              # 128

    # Batch tile: multiple of 16 (bf16 sublane pack); capped at 512 so the
    # double-buffered activation tiles fit v5e's 16 MiB scoped VMEM default.
    tb = min(tb_max, _round_up(B, 16))
    Bp = _round_up(B, tb)
    if Bp != B:
        pooled = jnp.pad(pooled, ((0, Bp - B), (0, 0)))

    # bf16 for the MXU streams; biases / accumulation stay f32.
    pooled_bf = pooled.astype(jnp.bfloat16)
    pool_w_bf = pool_w.astype(jnp.bfloat16)
    w1_bf = w1.astype(jnp.bfloat16)

    # Pad fc2 weight to 128 output lanes -> lane-dense [TB,128] output slab.
    w2_pad = (jnp.zeros((H1, 128), jnp.float32)
              .at[:, 0:1].set(w2)
              .astype(jnp.bfloat16))
    b2_s = b2.reshape(1, 1).astype(jnp.float32)               # SMEM scalar

    out = pl.pallas_call(
        fused_head_kernel,
        out_shape=jax.ShapeDtypeStruct((Bp, 128), jnp.float32),
        grid=(Bp // tb,),
        in_specs=[
            pl.BlockSpec((tb, H), lambda i: (i, 0)),          # pooled (bf16, tiled)
            pl.BlockSpec((H, H), lambda i: (0, 0)),           # pool_w (bf16, resident)
            pl.BlockSpec((1, H), lambda i: (0, 0)),           # pool_b (f32)
            pl.BlockSpec((H, H1), lambda i: (0, 0)),          # w1 (bf16, resident)
            pl.BlockSpec((1, H1), lambda i: (0, 0)),          # b1 (f32)
            pl.BlockSpec((H1, 128), lambda i: (0, 0)),        # w2 padded (bf16)
            pl.BlockSpec(memory_space=pltpu.MemorySpace.SMEM),  # b2 scalar
        ],
        out_specs=pl.BlockSpec((tb, 128), lambda i: (i, 0)),
        compiler_params=pltpu.CompilerParams(
            dimension_semantics=("parallel",),
        ),
    )(pooled_bf, pool_w_bf, pool_b, w1_bf, b1, w2_pad, b2_s)

    return out[:B, 0:1]                                       # real column / rows


def masked_mean_embed(sent_id, mask, emb_table):
    """Plain-JAX glue for the encoder stub: embedding gather + masked mean.

    Data-dependent gather has no clean BlockSpec path; the tanh pooler matmul
    that follows is fused into the Pallas kernel.
    """
    h = emb_table[sent_id]                                    # [B, S, 768]
    m = mask.astype(jnp.float32)[..., None]                   # [B, S, 1]
    return (h * m).sum(axis=1) / jnp.maximum(m.sum(axis=1), 1.0)   # [B, 768]


if __name__ == "__main__":
    B, S = 2, 8            # small batch / sequence
    H, H1 = 768, 128       # fixed by fc1/fc2 in LM_Arch
    VOCAB = 64

    key = jax.random.PRNGKey(0)
    ks = jax.random.split(key, 8)

    # Inputs (match LM_Arch.forward signature: sent_id, mask).
    sent_id = jax.random.randint(ks[0], (B, S), 0, VOCAB, dtype=jnp.int32)
    mask = jnp.ones((B, S), dtype=jnp.int32).at[1, 5:].set(0)

    # Synthetic BERT-stub parameters (the real `lm_model` is injected and is
    # not part of LM_Arch's own parameters).
    emb_table = 0.02 * jax.random.normal(ks[1], (VOCAB, H), jnp.float32)
    pool_w = 0.02 * jax.random.normal(ks[2], (H, H), jnp.float32)
    pool_b = jnp.zeros((1, H), jnp.float32)

    # LM_Arch head parameters (fc1: 768->128, fc2: 128->1), deterministic.
    w1 = 0.02 * jax.random.normal(ks[3], (H, H1), jnp.float32)
    b1 = 0.02 * jax.random.normal(ks[4], (1, H1), jnp.float32)
    w2 = 0.02 * jax.random.normal(ks[5], (H1, 1), jnp.float32)
    b2 = 0.02 * jax.random.normal(ks[6], (1, 1), jnp.float32)

    # Forward pass: gather + masked mean in JAX glue, pooler + head in Pallas.
    pooled = masked_mean_embed(sent_id, mask, emb_table)
    out = lm_arch_forward(pooled, pool_w, pool_b, w1, b1, w2, b2)
    out = jax.block_until_ready(out)

    assert out.shape == (B, 1), out.shape
    assert bool(jnp.all((out > 0.0) & (out < 1.0))), "sigmoid range violated"
    print("KERNEL_OK")
</pallas_src>

<mosaic_0001>
module attributes {stable_mosaic.version = 11 : i64} {
  func.func @fused_head_kernel(%arg0: i32, %arg1: memref<16x768xbf16, #tpu.memory_space<vmem>>, %arg2: memref<768x768xbf16, #tpu.memory_space<vmem>>, %arg3: memref<1x768xf32, #tpu.memory_space<vmem>>, %arg4: memref<768x128xbf16, #tpu.memory_space<vmem>>, %arg5: memref<1x128xf32, #tpu.memory_space<vmem>>, %arg6: memref<128x128xbf16, #tpu.memory_space<vmem>>, %arg7: memref<1x1xf32, #tpu.memory_space<smem>>, %arg8: memref<16x128xf32, #tpu.memory_space<vmem>>) attributes {dimension_semantics = [#tpu.dimension_semantics<parallel>], iteration_bounds = array<i64: 1>, scalar_prefetch = 0 : i64, scratch_operands = 0 : i64, tpu.core_type = #tpu.core_type<tc>, window_params = [{transform_indices = @transform_0, window_bounds = array<i64: 16, 768>}, {pipeline_mode = #tpu.pipeline_mode<synchronous>, transform_indices = @transform_1, window_bounds = array<i64: 768, 768>}, {pipeline_mode = #tpu.pipeline_mode<synchronous>, transform_indices = @transform_2, window_bounds = array<i64: 1, 768>}, {pipeline_mode = #tpu.pipeline_mode<synchronous>, transform_indices = @transform_3, window_bounds = array<i64: 768, 128>}, {pipeline_mode = #tpu.pipeline_mode<synchronous>, transform_indices = @transform_4, window_bounds = array<i64: 1, 128>}, {pipeline_mode = #tpu.pipeline_mode<synchronous>, transform_indices = @transform_5, window_bounds = array<i64: 128, 128>}, {transform_indices = @transform_6, window_bounds = array<i64: 1, 1>}, {transform_indices = @transform_7, window_bounds = array<i64: 16, 128>}]} {
    %c0 = arith.constant 0 : index
    %c0_0 = arith.constant 0 : index
    %0 = vector.load %arg1[%c0, %c0_0] : memref<16x768xbf16, #tpu.memory_space<vmem>>, vector<16x768xbf16>
    %c0_1 = arith.constant 0 : index
    %c0_2 = arith.constant 0 : index
    %1 = vector.load %arg2[%c0_1, %c0_2] : memref<768x768xbf16, #tpu.memory_space<vmem>>, vector<768x768xbf16>
    %cst = arith.constant dense<0.000000e+00> : vector<16x768xf32>
    %2 = tpu.matmul %0, %1, %cst {dimension_numbers = #tpu.dot_dimension_numbers<[1], [0], [0], [1], [0, 0, 1, 1], [], []>} : vector<16x768xbf16>, vector<768x768xbf16>, vector<16x768xf32> -> vector<16x768xf32>
    %c0_3 = arith.constant 0 : index
    %c0_4 = arith.constant 0 : index
    %3 = vector.load %arg3[%c0_3, %c0_4] : memref<1x768xf32, #tpu.memory_space<vmem>>, vector<1x768xf32>
    %4 = vector.broadcast %3 : vector<1x768xf32> to vector<16x768xf32>
    %5 = arith.addf %2, %4 : vector<16x768xf32>
    %6 = math.tanh %5 : vector<16x768xf32>
    %7 = arith.truncf %6 : vector<16x768xf32> to vector<16x768xbf16>
    %c0_5 = arith.constant 0 : index
    %c0_6 = arith.constant 0 : index
    %8 = vector.load %arg4[%c0_5, %c0_6] : memref<768x128xbf16, #tpu.memory_space<vmem>>, vector<768x128xbf16>
    %cst_7 = arith.constant dense<0.000000e+00> : vector<16x128xf32>
    %9 = tpu.matmul %7, %8, %cst_7 {dimension_numbers = #tpu.dot_dimension_numbers<[1], [0], [0], [1], [0, 0, 1, 1], [], []>} : vector<16x768xbf16>, vector<768x128xbf16>, vector<16x128xf32> -> vector<16x128xf32>
    %c0_8 = arith.constant 0 : index
    %c0_9 = arith.constant 0 : index
    %10 = vector.load %arg5[%c0_8, %c0_9] : memref<1x128xf32, #tpu.memory_space<vmem>>, vector<1x128xf32>
    %11 = vector.broadcast %10 : vector<1x128xf32> to vector<16x128xf32>
    %12 = arith.addf %9, %11 : vector<16x128xf32>
    %cst_10 = arith.constant 0.000000e+00 : f32
    %13 = vector.broadcast %cst_10 : f32 to vector<16x128xf32>
    %14 = arith.maximumf %12, %13 : vector<16x128xf32>
    %15 = arith.truncf %14 : vector<16x128xf32> to vector<16x128xbf16>
    %c0_11 = arith.constant 0 : index
    %c0_12 = arith.constant 0 : index
    %16 = vector.load %arg6[%c0_11, %c0_12] : memref<128x128xbf16, #tpu.memory_space<vmem>>, vector<128x128xbf16>
    %cst_13 = arith.constant dense<0.000000e+00> : vector<16x128xf32>
    %17 = tpu.matmul %15, %16, %cst_13 {dimension_numbers = #tpu.dot_dimension_numbers<[1], [0], [0], [1], [0, 0, 1, 1], [], []>} : vector<16x128xbf16>, vector<128x128xbf16>, vector<16x128xf32> -> vector<16x128xf32>
    %c0_14 = arith.constant 0 : index
    %c0_15 = arith.constant 0 : index
    %18 = memref.load %arg7[%c0_14, %c0_15] : memref<1x1xf32, #tpu.memory_space<smem>>
    %19 = vector.broadcast %18 : f32 to vector<16x128xf32>
    %20 = arith.addf %17, %19 : vector<16x128xf32>
    %21 = arith.negf %20 : vector<16x128xf32>
    %22 = math.exp %21 : vector<16x128xf32>
    %cst_16 = arith.constant 1.000000e+00 : f32
    %23 = vector.broadcast %cst_16 : f32 to vector<16x128xf32>
    %24 = arith.addf %23, %22 : vector<16x128xf32>
    %25 = arith.divf %23, %24 : vector<16x128xf32>
    %c0_17 = arith.constant 0 : index
    %c0_18 = arith.constant 0 : index
    %26 = vector.load %arg8[%c0_17, %c0_18] : memref<16x128xf32, #tpu.memory_space<vmem>>, vector<16x128xf32>
    tpu.vector_store %arg8[%c0_17, %c0_18], %25 {strides = array<i32>} : memref<16x128xf32, #tpu.memory_space<vmem>>, vector<16x128xf32>,
    return
  }
  func.func @transform_0(%arg0: i32) -> (i32, i32) {
    %c0_i32 = arith.constant 0 : i32
    %c0_i32_0 = arith.constant 0 : i32
    return %arg0, %c0_i32 : i32, i32
  }
  func.func @transform_1(%arg0: i32) -> (i32, i32) {
    %c0_i32 = arith.constant 0 : i32
    %c0_i32_0 = arith.constant 0 : i32
    %c0_i32_1 = arith.constant 0 : i32
    return %c0_i32, %c0_i32_0 : i32, i32
  }
  func.func @transform_2(%arg0: i32) -> (i32, i32) {
    %c0_i32 = arith.constant 0 : i32
    %c0_i32_0 = arith.constant 0 : i32
    %c0_i32_1 = arith.constant 0 : i32
    return %c0_i32, %c0_i32_0 : i32, i32
  }
  func.func @transform_3(%arg0: i32) -> (i32, i32) {
    %c0_i32 = arith.constant 0 : i32
    %c0_i32_0 = arith.constant 0 : i32
    %c0_i32_1 = arith.constant 0 : i32
    return %c0_i32, %c0_i32_0 : i32, i32
  }
  func.func @transform_4(%arg0: i32) -> (i32, i32) {
    %c0_i32 = arith.constant 0 : i32
    %c0_i32_0 = arith.constant 0 : i32
    %c0_i32_1 = arith.constant 0 : i32
    return %c0_i32, %c0_i32_0 : i32, i32
  }
  func.func @transform_5(%arg0: i32) -> (i32, i32) {
    %c0_i32 = arith.constant 0 : i32
    %c0_i32_0 = arith.constant 0 : i32
    %c0_i32_1 = arith.constant 0 : i32
    return %c0_i32, %c0_i32_0 : i32, i32
  }
  func.func @transform_6(%arg0: i32) -> (i32, i32) {
    %c0_i32 = arith.constant 0 : i32
    %c0_i32_0 = arith.constant 0 : i32
    %c0_i32_1 = arith.constant 0 : i32
    return %c0_i32, %c0_i32_0 : i32, i32
  }
  func.func @transform_7(%arg0: i32) -> (i32, i32) {
    %c0_i32 = arith.constant 0 : i32
    %c0_i32_0 = arith.constant 0 : i32
    return %arg0, %c0_i32 : i32, i32
  }
}

</mosaic_0001>

<llo_original>
// kernel: tpu_custom_call.1
$region0: #{tpu_custom_call.1}
  #allocation0 [shape = 'u32[]', space=smem, size = 0x4, offset = 0x4, fixed_abs, tag = 'smem constant byte address 0x4 - core index']
  #allocation1 [shape = 'u32[144,128]{1,0:T(1,128)}', space=vmem, size = 0x12000, scoped, tag = 'internal scratch']
  #allocation2 [shape = 'f32[1,1]{1,0:T(1,128)S(6)}', space=smem, size = 0x200, scoped, tag = 'scoped memory for tpu_custom_call.1']
  %s0 = inlined_call_operand.hbm [shape: bf16[16,768], index: 0, kind: input, shape index: {}]
  %s1 = inlined_call_operand.hbm [shape: bf16[768,768], index: 1, kind: input, shape index: {}]
  %s2 = inlined_call_operand.hbm [shape: f32[1,768], index: 2, kind: input, shape index: {}]
  %s3 = inlined_call_operand.hbm [shape: bf16[768,128], index: 3, kind: input, shape index: {}]
  %s4 = inlined_call_operand.hbm [shape: f32[1,128], index: 4, kind: input, shape index: {}]
  %s5 = inlined_call_operand.hbm [shape: bf16[128,128], index: 5, kind: input, shape index: {}]
  %s6 = inlined_call_operand.<no memory space> [shape: f32[1,1], index: 6, kind: input, shape index: {}]
  %s7 = inlined_call_operand.hbm [shape: f32[16,128], index: 7, kind: output, shape index: {}]
  %s8 = sld [smem:[#allocation0]]
  $region62: #{tpu_custom_call.1} parent=0
    _
  %s10 = ssub.s32 1, %s8
  %s11 = scalar_select 0, %s10, %s8
  %12 = sst [smem:[#allocation2]] %s6
  $region1: #{tpu_custom_call.1} parent=0
    #allocation3 [shape = 'u8[24576]{0}', space=vmem, size = 0x6000, scoped, tag = 'input window, operand 0, single buffered']
    #allocation4 [shape = 's32[1]{0}', space=sflag, size = 0x4, scoped, tag = 'scoped memory for tpu_custom_call.1']
    #allocation5 [shape = 's32[1]{0}', space=sflag, size = 0x4, scoped, tag = 'scoped memory for tpu_custom_call.1']
    #allocation6 [shape = 'u8[1179648]{0}', space=vmem, size = 0x120000, scoped, tag = 'input window, operand 1, single buffered']
    #allocation7 [shape = 's32[1]{0}', space=sflag, size = 0x4, scoped, tag = 'scoped memory for tpu_custom_call.1']
    #allocation8 [shape = 'u8[3072]{0}', space=vmem, size = 0xc00, scoped, tag = 'input window, operand 2, single buffered']
    #allocation9 [shape = 'u8[196608]{0}', space=vmem, size = 0x30000, scoped, tag = 'input window, operand 3, single buffered']
    #allocation10 [shape = 's32[1]{0}', space=sflag, size = 0x4, scoped, tag = 'scoped memory for tpu_custom_call.1']
    #allocation11 [shape = 'u8[512]{0}', space=vmem, size = 0x400, scoped, tag = 'input window, operand 4, single buffered']
    #allocation12 [shape = 'u8[32768]{0}', space=vmem, size = 0x8000, scoped, tag = 'input window, operand 5, single buffered']
    #allocation13 [shape = 's32[1]{0}', space=sflag, size = 0x4, scoped, tag = 'scoped memory for tpu_custom_call.1']
    #allocation14 [shape = 'u8[8192]{0}', space=vmem, size = 0x2000, scoped, tag = 'output window, operand 0, single buffered']
    %13 = vsyncpa [#allocation4], 0
    %14 = vsyncpa [#allocation7], 0
    %15 = vsyncpa [#allocation10], 0
    %16 = vsyncpa [#allocation13], 0
    %17 = vsyncpa [#allocation5], 0
    // Predicated region
    $region2: #{tpu_custom_call.1} parent=1 // pred_check
      _
    $region3: #{tpu_custom_call.1} parent=1 // pred_check_branch
      %19 = sbr.rel (0) target = $region5
    $region4: #{tpu_custom_call.1} parent=1 // pred_region
      %s21 = ssub.s32 768, 768
      %22 = vsyncadd [#allocation4], %s21
      %s23 = sshll.u32 [#allocation3], 4
      %s24 = int_to_ptr.vmem [resolvable:$true] %s23
      %29 = dma.hbm_to_vmem [thread:$0]  %s0, 768, %s24, [#allocation4], 384, 384, 24
    $region5: #{tpu_custom_call.1} parent=1 // pred_fallthru
      _
    // Predicated region
    $region6: #{tpu_custom_call.1} parent=1 // pred_check
      _
    $region7: #{tpu_custom_call.1} parent=1 // pred_check_branch
      %31 = sbr.rel (0) target = $region9
    $region8: #{tpu_custom_call.1} parent=1 // pred_region
      %s33 = ssub.s32 36864, 36864
      %34 = vsyncadd [#allocation7], %s33
      %s35 = sshll.u32 [#allocation6], 4
      %s36 = int_to_ptr.vmem [resolvable:$true] %s35
      %41 = dma.hbm_to_vmem [thread:$0]  %s1, 36864, %s36, [#allocation7], 384, 384, 24
    $region9: #{tpu_custom_call.1} parent=1 // pred_fallthru
      _
    // Predicated region
    $region10: #{tpu_custom_call.1} parent=1 // pred_check
      _
    $region11: #{tpu_custom_call.1} parent=1 // pred_check_branch
      %43 = sbr.rel (0) target = $region13
    $region12: #{tpu_custom_call.1} parent=1 // pred_region
      %s45 = ssub.s32 96, 96
      %46 = vsyncadd [#allocation7], %s45
      %s48 = sshll.u32 [#allocation8], 4
      %s49 = int_to_ptr.vmem [resolvable:$true] %s48
      %51 = dma.hbm_to_vmem [thread:$0]  %s2, 96, %s49, [#allocation7]
    $region13: #{tpu_custom_call.1} parent=1 // pred_fallthru
      _
    // Predicated region
    $region14: #{tpu_custom_call.1} parent=1 // pred_check
      _
    $region15: #{tpu_custom_call.1} parent=1 // pred_check_branch
      %53 = sbr.rel (0) target = $region17
    $region16: #{tpu_custom_call.1} parent=1 // pred_region
      %s55 = ssub.s32 6144, 6144
      %56 = vsyncadd [#allocation10], %s55
      %s57 = sshll.u32 [#allocation9], 4
      %s58 = int_to_ptr.vmem [resolvable:$true] %s57
      %63 = dma.hbm_to_vmem [thread:$0]  %s3, 6144, %s58, [#allocation10], 64, 64, 4
    $region17: #{tpu_custom_call.1} parent=1 // pred_fallthru
      _
    // Predicated region
    $region18: #{tpu_custom_call.1} parent=1 // pred_check
      _
    $region19: #{tpu_custom_call.1} parent=1 // pred_check_branch
      %65 = sbr.rel (0) target = $region21
    $region20: #{tpu_custom_call.1} parent=1 // pred_region
      %s67 = ssub.s32 16, 16
      %68 = vsyncadd [#allocation10], %s67
      %s70 = sshll.u32 [#allocation11], 4
      %s71 = int_to_ptr.vmem [resolvable:$true] %s70
      %73 = dma.hbm_to_vmem [thread:$0]  %s4, 16, %s71, [#allocation10]
    $region21: #{tpu_custom_call.1} parent=1 // pred_fallthru
      _
    // Predicated region
    $region22: #{tpu_custom_call.1} parent=1 // pred_check
      _
    $region23: #{tpu_custom_call.1} parent=1 // pred_check_branch
      %75 = sbr.rel (0) target = $region25
    $region24: #{tpu_custom_call.1} parent=1 // pred_region
      %s77 = ssub.s32 1024, 1024
      %78 = vsyncadd [#allocation13], %s77
      %s79 = sshll.u32 [#allocation12], 4
      %s80 = int_to_ptr.vmem [resolvable:$true] %s79
      %85 = dma.hbm_to_vmem [thread:$0]  %s5, 1024, %s80, [#allocation13], 64, 64, 4
    $region25: #{tpu_custom_call.1} parent=1 // pred_fallthru
      _
    // Predicated region
    $region26: #{tpu_custom_call.1} parent=1 // pred_check
      _
    $region27: #{tpu_custom_call.1} parent=1 // pred_check_branch
      %87 = sbr.rel (0) target = $region29
    $region28: #{tpu_custom_call.1} parent=1 // pred_region
      _
    $region29: #{tpu_custom_call.1} parent=1 // pred_fallthru
      _
    // Predicated region
    $region30: #{tpu_custom_call.1} parent=1 // pred_check
      _
    $region31: #{tpu_custom_call.1} parent=1 // pred_check_branch
      %89 = sbr.rel (0) target = $region33
    $region32: #{tpu_custom_call.1} parent=1 // pred_region
      %90 = dma.done [#allocation4], 768
    $region33: #{tpu_custom_call.1} parent=1 // pred_fallthru
      _
    // Predicated region
    $region34: #{tpu_custom_call.1} parent=1 // pred_check
      _
    $region35: #{tpu_custom_call.1} parent=1 // pred_check_branch
      %92 = sbr.rel (0) target = $region37
    $region36: #{tpu_custom_call.1} parent=1 // pred_region
      %93 = dma.done [#allocation7], 36864
    $region37: #{tpu_custom_call.1} parent=1 // pred_fallthru
      _
    // Predicated region
    $region38: #{tpu_custom_call.1} parent=1 // pred_check
      _
    $region39: #{tpu_custom_call.1} parent=1 // pred_check_branch
      %95 = sbr.rel (0) target = $region41
    $region40: #{tpu_custom_call.1} parent=1 // pred_region
      %96 = dma.done [#allocation7], 96
    $region41: #{tpu_custom_call.1} parent=1 // pred_fallthru
      _
    // Predicated region
    $region42: #{tpu_custom_call.1} parent=1 // pred_check
      _
    $region43: #{tpu_custom_call.1} parent=1 // pred_check_branch
      %98 = sbr.rel (0) target = $region45
    $region44: #{tpu_custom_call.1} parent=1 // pred_region
      %99 = dma.done [#allocation10], 6144
    $region45: #{tpu_custom_call.1} parent=1 // pred_fallthru
      _
    // Predicated region
    $region46: #{tpu_custom_call.1} parent=1 // pred_check
      _
    $region47: #{tpu_custom_call.1} parent=1 // pred_check_branch
      %101 = sbr.rel (0) target = $region49
    $region48: #{tpu_custom_call.1} parent=1 // pred_region
      %102 = dma.done [#allocation10], 16
    $region49: #{tpu_custom_call.1} parent=1 // pred_fallthru
      _
    // Predicated region
    $region50: #{tpu_custom_call.1} parent=1 // pred_check
      _
    $region51: #{tpu_custom_call.1} parent=1 // pred_check_branch
      %104 = sbr.rel (0) target = $region53
    $region52: #{tpu_custom_call.1} parent=1 // pred_region
      %105 = dma.done [#allocation13], 1024
    $region53: #{tpu_custom_call.1} parent=1 // pred_fallthru
      _
    %v107 = vld [vmem:[#allocation3] sm:$0xff]
    %v108 = vld [vmem:[#allocation3 + $0x8] sm:$0xff]
    %v109 = vld [vmem:[#allocation3 + $0x10] sm:$0xff]
    %v110 = vld [vmem:[#allocation3 + $0x18] sm:$0xff]
    %v111 = vld [vmem:[#allocation3 + $0x20] sm:$0xff]
    %v112 = vld [vmem:[#allocation3 + $0x28] sm:$0xff]
    %v113 = vld [vmem:[#allocation6] sm:$0xff]
    %v114 = vld [vmem:[#allocation6 + $0x8] sm:$0xff]
    %v115 = vld [vmem:[#allocation6 + $0x10] sm:$0xff]
    %v116 = vld [vmem:[#allocation6 + $0x18] sm:$0xff]
    %v117 = vld [vmem:[#allocation6 + $0x20] sm:$0xff]
    %v118 = vld [vmem:[#allocation6 + $0x28] sm:$0xff]
    %v119 = vld [vmem:[#allocation6 + $0x30] sm:$0xff]
    %v120 = vld [vmem:[#allocation6 + $0x38] sm:$0xff]
    %v121 = vld [vmem:[#allocation6 + $0x40] sm:$0xff]
    %v122 = vld [vmem:[#allocation6 + $0x48] sm:$0xff]
    %v123 = vld [vmem:[#allocation6 + $0x50] sm:$0xff]
    %v124 = vld [vmem:[#allocation6 + $0x58] sm:$0xff]
    %v125 = vld [vmem:[#allocation6 + $0x60] sm:$0xff]
    %v126 = vld [vmem:[#allocation6 + $0x68] sm:$0xff]
    %v127 = vld [vmem:[#allocation6 + $0x70] sm:$0xff]
    %v128 = vld [vmem:[#allocation6 + $0x78] sm:$0xff]
    %v129 = vld [vmem:[#allocation6 + $0x80] sm:$0xff]
    %v130 = vld [vmem:[#allocation6 + $0x88] sm:$0xff]
    %v131 = vld [vmem:[#allocation6 + $0x90] sm:$0xff]
    %v132 = vld [vmem:[#allocation6 + $0x98] sm:$0xff]
    %v133 = vld [vmem:[#allocation6 + $0xa0] sm:$0xff]
    %v134 = vld [vmem:[#allocation6 + $0xa8] sm:$0xff]
    %v135 = vld [vmem:[#allocation6 + $0xb0] sm:$0xff]
    %v136 = vld [vmem:[#allocation6 + $0xb8] sm:$0xff]
    %v137 = vld [vmem:[#allocation6 + $0xc0] sm:$0xff]
    %v138 = vld [vmem:[#allocation6 + $0xc8] sm:$0xff]
    %v139 = vld [vmem:[#allocation6 + $0xd0] sm:$0xff]
    %v140 = vld [vmem:[#allocation6 + $0xd8] sm:$0xff]
    %v141 = vld [vmem:[#allocation6 + $0xe0] sm:$0xff]
    %v142 = vld [vmem:[#allocation6 + $0xe8] sm:$0xff]
    %v143 = vld [vmem:[#allocation6 + $0xf0] sm:$0xff]
    %v144 = vld [vmem:[#allocation6 + $0xf8] sm:$0xff]
    %v145 = vld [vmem:[#allocation6 + $0x100] sm:$0xff]
    %v146 = vld [vmem:[#allocation6 + $0x108] sm:$0xff]
    %v147 = vld [vmem:[#allocation6 + $0x110] sm:$0xff]
    %v148 = vld [vmem:[#allocation6 + $0x118] sm:$0xff]
    %v149 = vld [vmem:[#allocation6 + $0x120] sm:$0xff]
    %v150 = vld [vmem:[#allocation6 + $0x128] sm:$0xff]
    %v151 = vld [vmem:[#allocation6 + $0x130] sm:$0xff]
    %v152 = vld [vmem:[#allocation6 + $0x138] sm:$0xff]
    %v153 = vld [vmem:[#allocation6 + $0x140] sm:$0xff]
    %v154 = vld [vmem:[#allocation6 + $0x148] sm:$0xff]
    %v155 = vld [vmem:[#allocation6 + $0x150] sm:$0xff]
    %v156 = vld [vmem:[#allocation6 + $0x158] sm:$0xff]
    %v157 = vld [vmem:[#allocation6 + $0x160] sm:$0xff]
    %v158 = vld [vmem:[#allocation6 + $0x168] sm:$0xff]
    %v159 = vld [vmem:[#allocation6 + $0x170] sm:$0xff]
    %v160 = vld [vmem:[#allocation6 + $0x178] sm:$0xff]
    %v161 = vld [vmem:[#allocation6 + $0x180] sm:$0xff]
    %v162 = vld [vmem:[#allocation6 + $0x188] sm:$0xff]
    %v163 = vld [vmem:[#allocation6 + $0x190] sm:$0xff]
    %v164 = vld [vmem:[#allocation6 + $0x198] sm:$0xff]
    %v165 = vld [vmem:[#allocation6 + $0x1a0] sm:$0xff]
    %v166 = vld [vmem:[#allocation6 + $0x1a8] sm:$0xff]
    %v167 = vld [vmem:[#allocation6 + $0x1b0] sm:$0xff]
    %v168 = vld [vmem:[#allocation6 + $0x1b8] sm:$0xff]
    %v169 = vld [vmem:[#allocation6 + $0x1c0] sm:$0xff]
    %v170 = vld [vmem:[#allocation6 + $0x1c8] sm:$0xff]
    %v171 = vld [vmem:[#allocation6 + $0x1d0] sm:$0xff]
    %v172 = vld [vmem:[#allocation6 + $0x1d8] sm:$0xff]
    %v173 = vld [vmem:[#allocation6 + $0x1e0] sm:$0xff]
    %v174 = vld [vmem:[#allocation6 + $0x1e8] sm:$0xff]
    %v175 = vld [vmem:[#allocation6 + $0x1f0] sm:$0xff]
    %v176 = vld [vmem:[#allocation6 + $0x1f8] sm:$0xff]
    %v177 = vld [vmem:[#allocation6 + $0x200] sm:$0xff]
    %v178 = vld [vmem:[#allocation6 + $0x208] sm:$0xff]
    %v179 = vld [vmem:[#allocation6 + $0x210] sm:$0xff]
    %v180 = vld [vmem:[#allocation6 + $0x218] sm:$0xff]
    %v181 = vld [vmem:[#allocation6 + $0x220] sm:$0xff]
    %v182 = vld [vmem:[#allocation6 + $0x228] sm:$0xff]
    %v183 = vld [vmem:[#allocation6 + $0x230] sm:$0xff]
    %v184 = vld [vmem:[#allocation6 + $0x238] sm:$0xff]
    %v185 = vld [vmem:[#allocation6 + $0x240] sm:$0xff]
    %v186 = vld [vmem:[#allocation6 + $0x248] sm:$0xff]
    %v187 = vld [vmem:[#allocation6 + $0x250] sm:$0xff]
    %v188 = vld [vmem:[#allocation6 + $0x258] sm:$0xff]
    %v189 = vld [vmem:[#allocation6 + $0x260] sm:$0xff]
    %v190 = vld [vmem:[#allocation6 + $0x268] sm:$0xff]
    %v191 = vld [vmem:[#allocation6 + $0x270] sm:$0xff]
    %v192 = vld [vmem:[#allocation6 + $0x278] sm:$0xff]
    %v193 = vld [vmem:[#allocation6 + $0x280] sm:$0xff]
    %v194 = vld [vmem:[#allocation6 + $0x288] sm:$0xff]
    %v195 = vld [vmem:[#allocation6 + $0x290] sm:$0xff]
    %v196 = vld [vmem:[#allocation6 + $0x298] sm:$0xff]
    %v197 = vld [vmem:[#allocation6 + $0x2a0] sm:$0xff]
    %v198 = vld [vmem:[#allocation6 + $0x2a8] sm:$0xff]
    %v199 = vld [vmem:[#allocation6 + $0x2b0] sm:$0xff]
    %v200 = vld [vmem:[#allocation6 + $0x2b8] sm:$0xff]
    %v201 = vld [vmem:[#allocation6 + $0x2c0] sm:$0xff]
    %v202 = vld [vmem:[#allocation6 + $0x2c8] sm:$0xff]
    %v203 = vld [vmem:[#allocation6 + $0x2d0] sm:$0xff]
    %v204 = vld [vmem:[#allocation6 + $0x2d8] sm:$0xff]
    %v205 = vld [vmem:[#allocation6 + $0x2e0] sm:$0xff]
    %v206 = vld [vmem:[#allocation6 + $0x2e8] sm:$0xff]
    %v207 = vld [vmem:[#allocation6 + $0x2f0] sm:$0xff]
    %v208 = vld [vmem:[#allocation6 + $0x2f8] sm:$0xff]
    %v209 = vld [vmem:[#allocation6 + $0x300] sm:$0xff]
    %v210 = vld [vmem:[#allocation6 + $0x308] sm:$0xff]
    %v211 = vld [vmem:[#allocation6 + $0x310] sm:$0xff]
    %v212 = vld [vmem:[#allocation6 + $0x318] sm:$0xff]
    %v213 = vld [vmem:[#allocation6 + $0x320] sm:$0xff]
    %v214 = vld [vmem:[#allocation6 + $0x328] sm:$0xff]
    %v215 = vld [vmem:[#allocation6 + $0x330] sm:$0xff]
    %v216 = vld [vmem:[#allocation6 + $0x338] sm:$0xff]
    %v217 = vld [vmem:[#allocation6 + $0x340] sm:$0xff]
    %v218 = vld [vmem:[#allocation6 + $0x348] sm:$0xff]
    %v219 = vld [vmem:[#allocation6 + $0x350] sm:$0xff]
    %v220 = vld [vmem:[#allocation6 + $0x358] sm:$0xff]
    %v221 = vld [vmem:[#allocation6 + $0x360] sm:$0xff]
    %v222 = vld [vmem:[#allocation6 + $0x368] sm:$0xff]
    %v223 = vld [vmem:[#allocation6 + $0x370] sm:$0xff]
    %v224 = vld [vmem:[#allocation6 + $0x378] sm:$0xff]
    %v225 = vld [vmem:[#allocation6 + $0x380] sm:$0xff]
    %v226 = vld [vmem:[#allocation6 + $0x388] sm:$0xff]
    %v227 = vld [vmem:[#allocation6 + $0x390] sm:$0xff]
    %v228 = vld [vmem:[#allocation6 + $0x398] sm:$0xff]
    %v229 = vld [vmem:[#allocation6 + $0x3a0] sm:$0xff]
    %v230 = vld [vmem:[#allocation6 + $0x3a8] sm:$0xff]
    %v231 = vld [vmem:[#allocation6 + $0x3b0] sm:$0xff]
    %v232 = vld [vmem:[#allocation6 + $0x3b8] sm:$0xff]
    %v233 = vld [vmem:[#allocation6 + $0x3c0] sm:$0xff]
    %v234 = vld [vmem:[#allocation6 + $0x3c8] sm:$0xff]
    %v235 = vld [vmem:[#allocation6 + $0x3d0] sm:$0xff]
    %v236 = vld [vmem:[#allocation6 + $0x3d8] sm:$0xff]
    %v237 = vld [vmem:[#allocation6 + $0x3e0] sm:$0xff]
    %v238 = vld [vmem:[#allocation6 + $0x3e8] sm:$0xff]
    %v239 = vld [vmem:[#allocation6 + $0x3f0] sm:$0xff]
    %v240 = vld [vmem:[#allocation6 + $0x3f8] sm:$0xff]
    %v241 = vld [vmem:[#allocation6 + $0x400] sm:$0xff]
    %v242 = vld [vmem:[#allocation6 + $0x408] sm:$0xff]
    %v243 = vld [vmem:[#allocation6 + $0x410] sm:$0xff]
    %v244 = vld [vmem:[#allocation6 + $0x418] sm:$0xff]
    %v245 = vld [vmem:[#allocation6 + $0x420] sm:$0xff]
    %v246 = vld [vmem:[#allocation6 + $0x428] sm:$0xff]
    %v247 = vld [vmem:[#allocation6 + $0x430] sm:$0xff]
    %v248 = vld [vmem:[#allocation6 + $0x438] sm:$0xff]
    %v249 = vld [vmem:[#allocation6 + $0x440] sm:$0xff]
    %v250 = vld [vmem:[#allocation6 + $0x448] sm:$0xff]
    %v251 = vld [vmem:[#allocation6 + $0x450] sm:$0xff]
    %v252 = vld [vmem:[#allocation6 + $0x458] sm:$0xff]
    %v253 = vld [vmem:[#allocation6 + $0x460] sm:$0xff]
    %v254 = vld [vmem:[#allocation6 + $0x468] sm:$0xff]
    %v255 = vld [vmem:[#allocation6 + $0x470] sm:$0xff]
    %v256 = vld [vmem:[#allocation6 + $0x478] sm:$0xff]
    %v257 = vld [vmem:[#allocation6 + $0x480] sm:$0xff]
    %v258 = vld [vmem:[#allocation6 + $0x488] sm:$0xff]
    %v259 = vld [vmem:[#allocation6 + $0x490] sm:$0xff]
    %v260 = vld [vmem:[#allocation6 + $0x498] sm:$0xff]
    %v261 = vld [vmem:[#allocation6 + $0x4a0] sm:$0xff]
    %v262 = vld [vmem:[#allocation6 + $0x4a8] sm:$0xff]
    %v263 = vld [vmem:[#allocation6 + $0x4b0] sm:$0xff]
    %v264 = vld [vmem:[#allocation6 + $0x4b8] sm:$0xff]
    %v265 = vld [vmem:[#allocation6 + $0x4c0] sm:$0xff]
    %v266 = vld [vmem:[#allocation6 + $0x4c8] sm:$0xff]
    %v267 = vld [vmem:[#allocation6 + $0x4d0] sm:$0xff]
    %v268 = vld [vmem:[#allocation6 + $0x4d8] sm:$0xff]
    %v269 = vld [vmem:[#allocation6 + $0x4e0] sm:$0xff]
    %v270 = vld [vmem:[#allocation6 + $0x4e8] sm:$0xff]
    %v271 = vld [vmem:[#allocation6 + $0x4f0] sm:$0xff]
    %v272 = vld [vmem:[#allocation6 + $0x4f8] sm:$0xff]
    %v273 = vld [vmem:[#allocation6 + $0x500] sm:$0xff]
    %v274 = vld [vmem:[#allocation6 + $0x508] sm:$0xff]
    %v275 = vld [vmem:[#allocation6 + $0x510] sm:$0xff]
    %v276 = vld [vmem:[#allocation6 + $0x518] sm:$0xff]
    %v277 = vld [vmem:[#allocation6 + $0x520] sm:$0xff]
    %v278 = vld [vmem:[#allocation6 + $0x528] sm:$0xff]
    %v279 = vld [vmem:[#allocation6 + $0x530] sm:$0xff]
    %v280 = vld [vmem:[#allocation6 + $0x538] sm:$0xff]
    %v281 = vld [vmem:[#allocation6 + $0x540] sm:$0xff]
    %v282 = vld [vmem:[#allocation6 + $0x548] sm:$0xff]
    %v283 = vld [vmem:[#allocation6 + $0x550] sm:$0xff]
    %v284 = vld [vmem:[#allocation6 + $0x558] sm:$0xff]
    %v285 = vld [vmem:[#allocation6 + $0x560] sm:$0xff]
    %v286 = vld [vmem:[#allocation6 + $0x568] sm:$0xff]
    %v287 = vld [vmem:[#allocation6 + $0x570] sm:$0xff]
    %v288 = vld [vmem:[#allocation6 + $0x578] sm:$0xff]
    %v289 = vld [vmem:[#allocation6 + $0x580] sm:$0xff]
    %v290 = vld [vmem:[#allocation6 + $0x588] sm:$0xff]
    %v291 = vld [vmem:[#allocation6 + $0x590] sm:$0xff]
    %v292 = vld [vmem:[#allocation6 + $0x598] sm:$0xff]
    %v293 = vld [vmem:[#allocation6 + $0x5a0] sm:$0xff]
    %v294 = vld [vmem:[#allocation6 + $0x5a8] sm:$0xff]
    %v295 = vld [vmem:[#allocation6 + $0x5b0] sm:$0xff]
    %v296 = vld [vmem:[#allocation6 + $0x5b8] sm:$0xff]
    %v297 = vld [vmem:[#allocation6 + $0x5c0] sm:$0xff]
    %v298 = vld [vmem:[#allocation6 + $0x5c8] sm:$0xff]
    %v299 = vld [vmem:[#allocation6 + $0x5d0] sm:$0xff]
    %v300 = vld [vmem:[#allocation6 + $0x5d8] sm:$0xff]
    %v301 = vld [vmem:[#allocation6 + $0x5e0] sm:$0xff]
    %v302 = vld [vmem:[#allocation6 + $0x5e8] sm:$0xff]
    %v303 = vld [vmem:[#allocation6 + $0x5f0] sm:$0xff]
    %v304 = vld [vmem:[#allocation6 + $0x5f8] sm:$0xff]
    %v305 = vld [vmem:[#allocation6 + $0x600] sm:$0xff]
    %v306 = vld [vmem:[#allocation6 + $0x608] sm:$0xff]
    %v307 = vld [vmem:[#allocation6 + $0x610] sm:$0xff]
    %v308 = vld [vmem:[#allocation6 + $0x618] sm:$0xff]
    %v309 = vld [vmem:[#allocation6 + $0x620] sm:$0xff]
    %v310 = vld [vmem:[#allocation6 + $0x628] sm:$0xff]
    %v311 = vld [vmem:[#allocation6 + $0x630] sm:$0xff]
    %v312 = vld [vmem:[#allocation6 + $0x638] sm:$0xff]
    %v313 = vld [vmem:[#allocation6 + $0x640] sm:$0xff]
    %v314 = vld [vmem:[#allocation6 + $0x648] sm:$0xff]
    %v315 = vld [vmem:[#allocation6 + $0x650] sm:$0xff]
    %v316 = vld [vmem:[#allocation6 + $0x658] sm:$0xff]
    %v317 = vld [vmem:[#allocation6 + $0x660] sm:$0xff]
    %v318 = vld [vmem:[#allocation6 + $0x668] sm:$0xff]
    %v319 = vld [vmem:[#allocation6 + $0x670] sm:$0xff]
    %v320 = vld [vmem:[#allocation6 + $0x678] sm:$0xff]
    %v321 = vld [vmem:[#allocation6 + $0x680] sm:$0xff]
    %v322 = vld [vmem:[#allocation6 + $0x688] sm:$0xff]
    %v323 = vld [vmem:[#allocation6 + $0x690] sm:$0xff]
    %v324 = vld [vmem:[#allocation6 + $0x698] sm:$0xff]
    %v325 = vld [vmem:[#allocation6 + $0x6a0] sm:$0xff]
    %v326 = vld [vmem:[#allocation6 + $0x6a8] sm:$0xff]
    %v327 = vld [vmem:[#allocation6 + $0x6b0] sm:$0xff]
    %v328 = vld [vmem:[#allocation6 + $0x6b8] sm:$0xff]
    %v329 = vld [vmem:[#allocation6 + $0x6c0] sm:$0xff]
    %v330 = vld [vmem:[#allocation6 + $0x6c8] sm:$0xff]
    %v331 = vld [vmem:[#allocation6 + $0x6d0] sm:$0xff]
    %v332 = vld [vmem:[#allocation6 + $0x6d8] sm:$0xff]
    %v333 = vld [vmem:[#allocation6 + $0x6e0] sm:$0xff]
    %v334 = vld [vmem:[#allocation6 + $0x6e8] sm:$0xff]
    %v335 = vld [vmem:[#allocation6 + $0x6f0] sm:$0xff]
    %v336 = vld [vmem:[#allocation6 + $0x6f8] sm:$0xff]
    %v337 = vld [vmem:[#allocation6 + $0x700] sm:$0xff]
    %v338 = vld [vmem:[#allocation6 + $0x708] sm:$0xff]
    %v339 = vld [vmem:[#allocation6 + $0x710] sm:$0xff]
    %v340 = vld [vmem:[#allocation6 + $0x718] sm:$0xff]
    %v341 = vld [vmem:[#allocation6 + $0x720] sm:$0xff]
    %v342 = vld [vmem:[#allocation6 + $0x728] sm:$0xff]
    %v343 = vld [vmem:[#allocation6 + $0x730] sm:$0xff]
    %v344 = vld [vmem:[#allocation6 + $0x738] sm:$0xff]
    %v345 = vld [vmem:[#allocation6 + $0x740] sm:$0xff]
    %v346 = vld [vmem:[#allocation6 + $0x748] sm:$0xff]
    %v347 = vld [vmem:[#allocation6 + $0x750] sm:$0xff]
    %v348 = vld [vmem:[#allocation6 + $0x758] sm:$0xff]
    %v349 = vld [vmem:[#allocation6 + $0x760] sm:$0xff]
    %v350 = vld [vmem:[#allocation6 + $0x768] sm:$0xff]
    %v351 = vld [vmem:[#allocation6 + $0x770] sm:$0xff]
    %v352 = vld [vmem:[#allocation6 + $0x778] sm:$0xff]
    %v353 = vld [vmem:[#allocation6 + $0x780] sm:$0xff]
    %v354 = vld [vmem:[#allocation6 + $0x788] sm:$0xff]
    %v355 = vld [vmem:[#allocation6 + $0x790] sm:$0xff]
    %v356 = vld [vmem:[#allocation6 + $0x798] sm:$0xff]
    %v357 = vld [vmem:[#allocation6 + $0x7a0] sm:$0xff]
    %v358 = vld [vmem:[#allocation6 + $0x7a8] sm:$0xff]
    %v359 = vld [vmem:[#allocation6 + $0x7b0] sm:$0xff]
    %v360 = vld [vmem:[#allocation6 + $0x7b8] sm:$0xff]
    %v361 = vld [vmem:[#allocation6 + $0x7c0] sm:$0xff]
    %v362 = vld [vmem:[#allocation6 + $0x7c8] sm:$0xff]
    %v363 = vld [vmem:[#allocation6 + $0x7d0] sm:$0xff]
    %v364 = vld [vmem:[#allocation6 + $0x7d8] sm:$0xff]
    %v365 = vld [vmem:[#allocation6 + $0x7e0] sm:$0xff]
    %v366 = vld [vmem:[#allocation6 + $0x7e8] sm:$0xff]
    %v367 = vld [vmem:[#allocation6 + $0x7f0] sm:$0xff]
    %v368 = vld [vmem:[#allocation6 + $0x7f8] sm:$0xff]
    %v369 = vld [vmem:[#allocation6 + $0x800] sm:$0xff]
    %v370 = vld [vmem:[#allocation6 + $0x808] sm:$0xff]
    %v371 = vld [vmem:[#allocation6 + $0x810] sm:$0xff]
    %v372 = vld [vmem:[#allocation6 + $0x818] sm:$0xff]
    %v373 = vld [vmem:[#allocation6 + $0x820] sm:$0xff]
    %v374 = vld [vmem:[#allocation6 + $0x828] sm:$0xff]
    %v375 = vld [vmem:[#allocation6 + $0x830] sm:$0xff]
    %v376 = vld [vmem:[#allocation6 + $0x838] sm:$0xff]
    %v377 = vld [vmem:[#allocation6 + $0x840] sm:$0xff]
    %v378 = vld [vmem:[#allocation6 + $0x848] sm:$0xff]
    %v379 = vld [vmem:[#allocation6 + $0x850] sm:$0xff]
    %v380 = vld [vmem:[#allocation6 + $0x858] sm:$0xff]
    %v381 = vld [vmem:[#allocation6 + $0x860] sm:$0xff]
    %v382 = vld [vmem:[#allocation6 + $0x868] sm:$0xff]
    %v383 = vld [vmem:[#allocation6 + $0x870] sm:$0xff]
    %v384 = vld [vmem:[#allocation6 + $0x878] sm:$0xff]
    %v385 = vld [vmem:[#allocation6 + $0x880] sm:$0xff]
    %v386 = vld [vmem:[#allocation6 + $0x888] sm:$0xff]
    %v387 = vld [vmem:[#allocation6 + $0x890] sm:$0xff]
    %v388 = vld [vmem:[#allocation6 + $0x898] sm:$0xff]
    %v389 = vld [vmem:[#allocation6 + $0x8a0] sm:$0xff]
    %v390 = vld [vmem:[#allocation6 + $0x8a8] sm:$0xff]
    %v391 = vld [vmem:[#allocation6 + $0x8b0] sm:$0xff]
    %v392 = vld [vmem:[#allocation6 + $0x8b8] sm:$0xff]
    %v393 = vld [vmem:[#allocation6 + $0x8c0] sm:$0xff]
    %v394 = vld [vmem:[#allocation6 + $0x8c8] sm:$0xff]
    %v395 = vld [vmem:[#allocation6 + $0x8d0] sm:$0xff]
    %v396 = vld [vmem:[#allocation6 + $0x8d8] sm:$0xff]
    %v397 = vld [vmem:[#allocation6 + $0x8e0] sm:$0xff]
    %v398 = vld [vmem:[#allocation6 + $0x8e8] sm:$0xff]
    %v399 = vld [vmem:[#allocation6 + $0x8f0] sm:$0xff]
    %v400 = vld [vmem:[#allocation6 + $0x8f8] sm:$0xff]
    %v401 = vld [vmem:[#allocation8] sm:$0x3f]
    %v403 = vlaneseq
    %v404 = vshrl.u32 %v403, 7
    %v405 = vsub.s32 0, %v404
    %v406 = vrot.slane %v401, %v405
    %v407 = vlaneseq
    %v408 = vshrl.u32 %v407, 7
    %v409 = vsub.s32 1, %v408
    %v410 = vrot.slane %v401, %v409
    %v411 = vlaneseq
    %v412 = vshrl.u32 %v411, 7
    %v413 = vsub.s32 2, %v412
    %v414 = vrot.slane %v401, %v413
    %v415 = vlaneseq
    %v416 = vshrl.u32 %v415, 7
    %v417 = vsub.s32 3, %v416
    %v418 = vrot.slane %v401, %v417
    %v419 = vlaneseq
    %v420 = vshrl.u32 %v419, 7
    %v421 = vsub.s32 4, %v420
    %v422 = vrot.slane %v401, %v421
    %v423 = vlaneseq
    %v424 = vshrl.u32 %v423, 7
    %v425 = vsub.s32 5, %v424
    %v426 = vrot.slane %v401, %v425
    %v439 = vunpack.c.l.b16 %v107
    %v440 = vunpack.c.h.b16 %v107
    %v441 = vunpack.c.l.b16 %v108
    %v442 = vunpack.c.h.b16 %v108
    %v443 = vunpack.c.l.b16 %v109
    %v444 = vunpack.c.h.b16 %v109
    %v445 = vunpack.c.l.b16 %v110
    %v446 = vunpack.c.h.b16 %v110
    %v447 = vunpack.c.l.b16 %v111
    %v448 = vunpack.c.h.b16 %v111
    %v449 = vunpack.c.l.b16 %v112
    %v450 = vunpack.c.h.b16 %v112
    %v451 = vpack.c.b16 %v445, %v439
    %v452 = vpack.c.b16 %v446, %v440
    %v453 = vpack.c.b16 %v447, %v441
    %v454 = vpack.c.b16 %v448, %v442
    %v455 = vpack.c.b16 %v449, %v443
    %v456 = vpack.c.b16 %v450, %v444
    %v751 = vunpack.c.l.b16 %v113
    %v752 = vunpack.c.h.b16 %v113
    %v753 = vunpack.c.l.b16 %v114
    %v754 = vunpack.c.h.b16 %v114
    %v755 = vunpack.c.l.b16 %v115
    %v756 = vunpack.c.h.b16 %v115
    %v757 = vunpack.c.l.b16 %v116
    %v758 = vunpack.c.h.b16 %v116
    %v759 = vunpack.c.l.b16 %v117
    %v760 = vunpack.c.h.b16 %v117
    %v761 = vunpack.c.l.b16 %v118
    %v762 = vunpack.c.h.b16 %v118
    %v763 = vunpack.c.l.b16 %v119
    %v764 = vunpack.c.h.b16 %v119
    %v765 = vunpack.c.l.b16 %v120
    %v766 = vunpack.c.h.b16 %v120
    %v767 = vunpack.c.l.b16 %v121
    %v768 = vunpack.c.h.b16 %v121
    %v769 = vunpack.c.l.b16 %v122
    %v770 = vunpack.c.h.b16 %v122
    %v771 = vunpack.c.l.b16 %v123
    %v772 = vunpack.c.h.b16 %v123
    %v773 = vunpack.c.l.b16 %v124
    %v774 = vunpack.c.h.b16 %v124
    %v775 = vunpack.c.l.b16 %v125
    %v776 = vunpack.c.h.b16 %v125
    %v777 = vunpack.c.l.b16 %v126
    %v778 = vunpack.c.h.b16 %v126
    %v779 = vunpack.c.l.b16 %v127
    %v780 = vunpack.c.h.b16 %v127
    %v781 = vunpack.c.l.b16 %v128
    %v782 = vunpack.c.h.b16 %v128
    %v783 = vunpack.c.l.b16 %v129
    %v784 = vunpack.c.h.b16 %v129
    %v785 = vunpack.c.l.b16 %v130
    %v786 = vunpack.c.h.b16 %v130
    %v787 = vunpack.c.l.b16 %v131
    %v788 = vunpack.c.h.b16 %v131
    %v789 = vunpack.c.l.b16 %v132
    %v790 = vunpack.c.h.b16 %v132
    %v791 = vunpack.c.l.b16 %v133
    %v792 = vunpack.c.h.b16 %v133
    %v793 = vunpack.c.l.b16 %v134
    %v794 = vunpack.c.h.b16 %v134
    %v795 = vunpack.c.l.b16 %v135
    %v796 = vunpack.c.h.b16 %v135
    %v797 = vunpack.c.l.b16 %v136
    %v798 = vunpack.c.h.b16 %v136
    %v799 = vunpack.c.l.b16 %v137
    %v800 = vunpack.c.h.b16 %v137
    %v801 = vunpack.c.l.b16 %v138
    %v802 = vunpack.c.h.b16 %v138
    %v803 = vunpack.c.l.b16 %v139
    %v804 = vunpack.c.h.b16 %v139
    %v805 = vunpack.c.l.b16 %v140
    %v806 = vunpack.c.h.b16 %v140
    %v807 = vunpack.c.l.b16 %v141
    %v808 = vunpack.c.h.b16 %v141
    %v809 = vunpack.c.l.b16 %v142
    %v810 = vunpack.c.h.b16 %v142
    %v811 = vunpack.c.l.b16 %v143
    %v812 = vunpack.c.h.b16 %v143
    %v813 = vunpack.c.l.b16 %v144
    %v814 = vunpack.c.h.b16 %v144
    %v815 = vunpack.c.l.b16 %v145
    %v816 = vunpack.c.h.b16 %v145
    %v817 = vunpack.c.l.b16 %v146
    %v818 = vunpack.c.h.b16 %v146
    %v819 = vunpack.c.l.b16 %v147
    %v820 = vunpack.c.h.b16 %v147
    %v821 = vunpack.c.l.b16 %v148
    %v822 = vunpack.c.h.b16 %v148
    %v823 = vunpack.c.l.b16 %v149
    %v824 = vunpack.c.h.b16 %v149
    %v825 = vunpack.c.l.b16 %v150
    %v826 = vunpack.c.h.b16 %v150
    %v827 = vunpack.c.l.b16 %v151
    %v828 = vunpack.c.h.b16 %v151
    %v829 = vunpack.c.l.b16 %v152
    %v830 = vunpack.c.h.b16 %v152
    %v831 = vunpack.c.l.b16 %v153
    %v832 = vunpack.c.h.b16 %v153
    %v833 = vunpack.c.l.b16 %v154
    %v834 = vunpack.c.h.b16 %v154
    %v835 = vunpack.c.l.b16 %v155
    %v836 = vunpack.c.h.b16 %v155
    %v837 = vunpack.c.l.b16 %v156
    %v838 = vunpack.c.h.b16 %v156
    %v839 = vunpack.c.l.b16 %v157
    %v840 = vunpack.c.h.b16 %v157
    %v841 = vunpack.c.l.b16 %v158
    %v842 = vunpack.c.h.b16 %v158
    %v843 = vunpack.c.l.b16 %v159
    %v844 = vunpack.c.h.b16 %v159
    %v845 = vunpack.c.l.b16 %v160
    %v846 = vunpack.c.h.b16 %v160
    %v847 = vunpack.c.l.b16 %v161
    %v848 = vunpack.c.h.b16 %v161
    %v849 = vunpack.c.l.b16 %v162
    %v850 = vunpack.c.h.b16 %v162
    %v851 = vunpack.c.l.b16 %v163
    %v852 = vunpack.c.h.b16 %v163
    %v853 = vunpack.c.l.b16 %v164
    %v854 = vunpack.c.h.b16 %v164
    %v855 = vunpack.c.l.b16 %v165
    %v856 = vunpack.c.h.b16 %v165
    %v857 = vunpack.c.l.b16 %v166
    %v858 = vunpack.c.h.b16 %v166
    %v859 = vunpack.c.l.b16 %v167
    %v860 = vunpack.c.h.b16 %v167
    %v861 = vunpack.c.l.b16 %v168
    %v862 = vunpack.c.h.b16 %v168
    %v863 = vunpack.c.l.b16 %v169
    %v864 = vunpack.c.h.b16 %v169
    %v865 = vunpack.c.l.b16 %v170
    %v866 = vunpack.c.h.b16 %v170
    %v867 = vunpack.c.l.b16 %v171
    %v868 = vunpack.c.h.b16 %v171
    %v869 = vunpack.c.l.b16 %v172
    %v870 = vunpack.c.h.b16 %v172
    %v871 = vunpack.c.l.b16 %v173
    %v872 = vunpack.c.h.b16 %v173
    %v873 = vunpack.c.l.b16 %v174
    %v874 = vunpack.c.h.b16 %v174
    %v875 = vunpack.c.l.b16 %v175
    %v876 = vunpack.c.h.b16 %v175
    %v877 = vunpack.c.l.b16 %v176
    %v878 = vunpack.c.h.b16 %v176
    %v879 = vunpack.c.l.b16 %v177
    %v880 = vunpack.c.h.b16 %v177
    %v881 = vunpack.c.l.b16 %v178
    %v882 = vunpack.c.h.b16 %v178
    %v883 = vunpack.c.l.b16 %v179
    %v884 = vunpack.c.h.b16 %v179
    %v885 = vunpack.c.l.b16 %v180
    %v886 = vunpack.c.h.b16 %v180
    %v887 = vunpack.c.l.b16 %v181
    %v888 = vunpack.c.h.b16 %v181
    %v889 = vunpack.c.l.b16 %v182
    %v890 = vunpack.c.h.b16 %v182
    %v891 = vunpack.c.l.b16 %v183
    %v892 = vunpack.c.h.b16 %v183
    %v893 = vunpack.c.l.b16 %v184
    %v894 = vunpack.c.h.b16 %v184
    %v895 = vunpack.c.l.b16 %v185
    %v896 = vunpack.c.h.b16 %v185
    %v897 = vunpack.c.l.b16 %v186
    %v898 = vunpack.c.h.b16 %v186
    %v899 = vunpack.c.l.b16 %v187
    %v900 = vunpack.c.h.b16 %v187
    %v901 = vunpack.c.l.b16 %v188
    %v902 = vunpack.c.h.b16 %v188
    %v903 = vunpack.c.l.b16 %v189
    %v904 = vunpack.c.h.b16 %v189
    %v905 = vunpack.c.l.b16 %v190
    %v906 = vunpack.c.h.b16 %v190
    %v907 = vunpack.c.l.b16 %v191
    %v908 = vunpack.c.h.b16 %v191
    %v909 = vunpack.c.l.b16 %v192
    %v910 = vunpack.c.h.b16 %v192
    %v911 = vunpack.c.l.b16 %v193
    %v912 = vunpack.c.h.b16 %v193
    %v913 = vunpack.c.l.b16 %v194
    %v914 = vunpack.c.h.b16 %v194
    %v915 = vunpack.c.l.b16 %v195
    %v916 = vunpack.c.h.b16 %v195
    %v917 = vunpack.c.l.b16 %v196
    %v918 = vunpack.c.h.b16 %v196
    %v919 = vunpack.c.l.b16 %v197
    %v920 = vunpack.c.h.b16 %v197
    %v921 = vunpack.c.l.b16 %v198
    %v922 = vunpack.c.h.b16 %v198
    %v923 = vunpack.c.l.b16 %v199
    %v924 = vunpack.c.h.b16 %v199
    %v925 = vunpack.c.l.b16 %v200
    %v926 = vunpack.c.h.b16 %v200
    %v927 = vunpack.c.l.b16 %v201
    %v928 = vunpack.c.h.b16 %v201
    %v929 = vunpack.c.l.b16 %v202
    %v930 = vunpack.c.h.b16 %v202
    %v931 = vunpack.c.l.b16 %v203
    %v932 = vunpack.c.h.b16 %v203
    %v933 = vunpack.c.l.b16 %v204
    %v934 = vunpack.c.h.b16 %v204
    %v935 = vunpack.c.l.b16 %v205
    %v936 = vunpack.c.h.b16 %v205
    %v937 = vunpack.c.l.b16 %v206
    %v938 = vunpack.c.h.b16 %v206
    %v939 = vunpack.c.l.b16 %v207
    %v940 = vunpack.c.h.b16 %v207
    %v941 = vunpack.c.l.b16 %v208
    %v942 = vunpack.c.h.b16 %v208
    %v943 = vunpack.c.l.b16 %v209
    %v944 = vunpack.c.h.b16 %v209
    %v945 = vunpack.c.l.b16 %v210
    %v946 = vunpack.c.h.b16 %v210
    %v947 = vunpack.c.l.b16 %v211
    %v948 = vunpack.c.h.b16 %v211
    %v949 = vunpack.c.l.b16 %v212
    %v950 = vunpack.c.h.b16 %v212
    %v951 = vunpack.c.l.b16 %v213
    %v952 = vunpack.c.h.b16 %v213
    %v953 = vunpack.c.l.b16 %v214
    %v954 = vunpack.c.h.b16 %v214
    %v955 = vunpack.c.l.b16 %v215
    %v956 = vunpack.c.h.b16 %v215
    %v957 = vunpack.c.l.b16 %v216
    %v958 = vunpack.c.h.b16 %v216
    %v959 = vunpack.c.l.b16 %v217
    %v960 = vunpack.c.h.b16 %v217
    %v961 = vunpack.c.l.b16 %v218
    %v962 = vunpack.c.h.b16 %v218
    %v963 = vunpack.c.l.b16 %v219
    %v964 = vunpack.c.h.b16 %v219
    %v965 = vunpack.c.l.b16 %v220
    %v966 = vunpack.c.h.b16 %v220
    %v967 = vunpack.c.l.b16 %v221
    %v968 = vunpack.c.h.b16 %v221
    %v969 = vunpack.c.l.b16 %v222
    %v970 = vunpack.c.h.b16 %v222
    %v971 = vunpack.c.l.b16 %v223
    %v972 = vunpack.c.h.b16 %v223
    %v973 = vunpack.c.l.b16 %v224
    %v974 = vunpack.c.h.b16 %v224
    %v975 = vunpack.c.l.b16 %v225
    %v976 = vunpack.c.h.b16 %v225
    %v977 = vunpack.c.l.b16 %v226
    %v978 = vunpack.c.h.b16 %v226
    %v979 = vunpack.c.l.b16 %v227
    %v980 = vunpack.c.h.b16 %v227
    %v981 = vunpack.c.l.b16 %v228
    %v982 = vunpack.c.h.b16 %v228
    %v983 = vunpack.c.l.b16 %v229
    %v984 = vunpack.c.h.b16 %v229
    %v985 = vunpack.c.l.b16 %v230
    %v986 = vunpack.c.h.b16 %v230
    %v987 = vunpack.c.l.b16 %v231
    %v988 = vunpack.c.h.b16 %v231
    %v989 = vunpack.c.l.b16 %v232
    %v990 = vunpack.c.h.b16 %v232
    %v991 = vunpack.c.l.b16 %v233
    %v992 = vunpack.c.h.b16 %v233
    %v993 = vunpack.c.l.b16 %v234
    %v994 = vunpack.c.h.b16 %v234
    %v995 = vunpack.c.l.b16 %v235
    %v996 = vunpack.c.h.b16 %v235
    %v997 = vunpack.c.l.b16 %v236
    %v998 = vunpack.c.h.b16 %v236
    %v999 = vunpack.c.l.b16 %v237
    %v1000 = vunpack.c.h.b16 %v237
    %v1001 = vunpack.c.l.b16 %v238
    %v1002 = vunpack.c.h.b16 %v238
    %v1003 = vunpack.c.l.b16 %v239
    %v1004 = vunpack.c.h.b16 %v239
    %v1005 = vunpack.c.l.b16 %v240
    %v1006 = vunpack.c.h.b16 %v240
    %v1007 = vunpack.c.l.b16 %v241
    %v1008 = vunpack.c.h.b16 %v241
    %v1009 = vunpack.c.l.b16 %v242
    %v1010 = vunpack.c.h.b16 %v242
    %v1011 = vunpack.c.l.b16 %v243
    %v1012 = vunpack.c.h.b16 %v243
    %v1013 = vunpack.c.l.b16 %v244
    %v1014 = vunpack.c.h.b16 %v244
    %v1015 = vunpack.c.l.b16 %v245
    %v1016 = vunpack.c.h.b16 %v245
    %v1017 = vunpack.c.l.b16 %v246
    %v1018 = vunpack.c.h.b16 %v246
    %v1019 = vunpack.c.l.b16 %v247
    %v1020 = vunpack.c.h.b16 %v247
    %v1021 = vunpack.c.l.b16 %v248
    %v1022 = vunpack.c.h.b16 %v248
    %v1023 = vunpack.c.l.b16 %v249
    %v1024 = vunpack.c.h.b16 %v249
    %v1025 = vunpack.c.l.b16 %v250
    %v1026 = vunpack.c.h.b16 %v250
    %v1027 = vunpack.c.l.b16 %v251
    %v1028 = vunpack.c.h.b16 %v251
    %v1029 = vunpack.c.l.b16 %v252
    %v1030 = vunpack.c.h.b16 %v252
    %v1031 = vunpack.c.l.b16 %v253
    %v1032 = vunpack.c.h.b16 %v253
    %v1033 = vunpack.c.l.b16 %v254
    %v1034 = vunpack.c.h.b16 %v254
    %v1035 = vunpack.c.l.b16 %v255
    %v1036 = vunpack.c.h.b16 %v255
    %v1037 = vunpack.c.l.b16 %v256
    %v1038 = vunpack.c.h.b16 %v256
    %v1039 = vunpack.c.l.b16 %v257
    %v1040 = vunpack.c.h.b16 %v257
    %v1041 = vunpack.c.l.b16 %v258
    %v1042 = vunpack.c.h.b16 %v258
    %v1043 = vunpack.c.l.b16 %v259
    %v1044 = vunpack.c.h.b16 %v259
    %v1045 = vunpack.c.l.b16 %v260
    %v1046 = vunpack.c.h.b16 %v260
    %v1047 = vunpack.c.l.b16 %v261
    %v1048 = vunpack.c.h.b16 %v261
    %v1049 = vunpack.c.l.b16 %v262
    %v1050 = vunpack.c.h.b16 %v262
    %v1051 = vunpack.c.l.b16 %v263
    %v1052 = vunpack.c.h.b16 %v263
    %v1053 = vunpack.c.l.b16 %v264
    %v1054 = vunpack.c.h.b16 %v264
    %v1055 = vunpack.c.l.b16 %v265
    %v1056 = vunpack.c.h.b16 %v265
    %v1057 = vunpack.c.l.b16 %v266
    %v1058 = vunpack.c.h.b16 %v266
    %v1059 = vunpack.c.l.b16 %v267
    %v1060 = vunpack.c.h.b16 %v267
    %v1061 = vunpack.c.l.b16 %v268
    %v1062 = vunpack.c.h.b16 %v268
    %v1063 = vunpack.c.l.b16 %v269
    %v1064 = vunpack.c.h.b16 %v269
    %v1065 = vunpack.c.l.b16 %v270
    %v1066 = vunpack.c.h.b16 %v270
    %v1067 = vunpack.c.l.b16 %v271
    %v1068 = vunpack.c.h.b16 %v271
    %v1069 = vunpack.c.l.b16 %v272
    %v1070 = vunpack.c.h.b16 %v272
    %v1071 = vunpack.c.l.b16 %v273
    %v1072 = vunpack.c.h.b16 %v273
    %v1073 = vunpack.c.l.b16 %v274
    %v1074 = vunpack.c.h.b16 %v274
    %v1075 = vunpack.c.l.b16 %v275
    %v1076 = vunpack.c.h.b16 %v275
    %v1077 = vunpack.c.l.b16 %v276
    %v1078 = vunpack.c.h.b16 %v276
    %v1079 = vunpack.c.l.b16 %v277
    %v1080 = vunpack.c.h.b16 %v277
    %v1081 = vunpack.c.l.b16 %v278
    %v1082 = vunpack.c.h.b16 %v278
    %v1083 = vunpack.c.l.b16 %v279
    %v1084 = vunpack.c.h.b16 %v279
    %v1085 = vunpack.c.l.b16 %v280
    %v1086 = vunpack.c.h.b16 %v280
    %v1087 = vunpack.c.l.b16 %v281
    %v1088 = vunpack.c.h.b16 %v281
    %v1089 = vunpack.c.l.b16 %v282
    %v1090 = vunpack.c.h.b16 %v282
    %v1091 = vunpack.c.l.b16 %v283
    %v1092 = vunpack.c.h.b16 %v283
    %v1093 = vunpack.c.l.b16 %v284
    %v1094 = vunpack.c.h.b16 %v284
    %v1095 = vunpack.c.l.b16 %v285
    %v1096 = vunpack.c.h.b16 %v285
    %v1097 = vunpack.c.l.b16 %v286
    %v1098 = vunpack.c.h.b16 %v286
    %v1099 = vunpack.c.l.b16 %v287
    %v1100 = vunpack.c.h.b16 %v287
    %v1101 = vunpack.c.l.b16 %v288
    %v1102 = vunpack.c.h.b16 %v288
    %v1103 = vunpack.c.l.b16 %v289
    %v1104 = vunpack.c.h.b16 %v289
    %v1105 = vunpack.c.l.b16 %v290
    %v1106 = vunpack.c.h.b16 %v290
    %v1107 = vunpack.c.l.b16 %v291
    %v1108 = vunpack.c.h.b16 %v291
    %v1109 = vunpack.c.l.b16 %v292
    %v1110 = vunpack.c.h.b16 %v292
    %v1111 = vunpack.c.l.b16 %v293
    %v1112 = vunpack.c.h.b16 %v293
    %v1113 = vunpack.c.l.b16 %v294
    %v1114 = vunpack.c.h.b16 %v294
    %v1115 = vunpack.c.l.b16 %v295
    %v1116 = vunpack.c.h.b16 %v295
    %v1117 = vunpack.c.l.b16 %v296
    %v1118 = vunpack.c.h.b16 %v296
    %v1119 = vunpack.c.l.b16 %v297
    %v1120 = vunpack.c.h.b16 %v297
    %v1121 = vunpack.c.l.b16 %v298
    %v1122 = vunpack.c.h.b16 %v298
    %v1123 = vunpack.c.l.b16 %v299
    %v1124 = vunpack.c.h.b16 %v299
    %v1125 = vunpack.c.l.b16 %v300
    %v1126 = vunpack.c.h.b16 %v300
    %v1127 = vunpack.c.l.b16 %v301
    %v1128 = vunpack.c.h.b16 %v301
    %v1129 = vunpack.c.l.b16 %v302
    %v1130 = vunpack.c.h.b16 %v302
    %v1131 = vunpack.c.l.b16 %v303
    %v1132 = vunpack.c.h.b16 %v303
    %v1133 = vunpack.c.l.b16 %v304
    %v1134 = vunpack.c.h.b16 %v304
    %v1135 = vunpack.c.l.b16 %v305
    %v1136 = vunpack.c.h.b16 %v305
    %v1137 = vunpack.c.l.b16 %v306
    %v1138 = vunpack.c.h.b16 %v306
    %v1139 = vunpack.c.l.b16 %v307
    %v1140 = vunpack.c.h.b16 %v307
    %v1141 = vunpack.c.l.b16 %v308
    %v1142 = vunpack.c.h.b16 %v308
    %v1143 = vunpack.c.l.b16 %v309
    %v1144 = vunpack.c.h.b16 %v309
    %v1145 = vunpack.c.l.b16 %v310
    %v1146 = vunpack.c.h.b16 %v310
    %v1147 = vunpack.c.l.b16 %v311
    %v1148 = vunpack.c.h.b16 %v311
    %v1149 = vunpack.c.l.b16 %v312
    %v1150 = vunpack.c.h.b16 %v312
    %v1151 = vunpack.c.l.b16 %v313
    %v1152 = vunpack.c.h.b16 %v313
    %v1153 = vunpack.c.l.b16 %v314
    %v1154 = vunpack.c.h.b16 %v314
    %v1155 = vunpack.c.l.b16 %v315
    %v1156 = vunpack.c.h.b16 %v315
    %v1157 = vunpack.c.l.b16 %v316
    %v1158 = vunpack.c.h.b16 %v316
    %v1159 = vunpack.c.l.b16 %v317
    %v1160 = vunpack.c.h.b16 %v317
    %v1161 = vunpack.c.l.b16 %v318
    %v1162 = vunpack.c.h.b16 %v318
    %v1163 = vunpack.c.l.b16 %v319
    %v1164 = vunpack.c.h.b16 %v319
    %v1165 = vunpack.c.l.b16 %v320
    %v1166 = vunpack.c.h.b16 %v320
    %v1167 = vunpack.c.l.b16 %v321
    %v1168 = vunpack.c.h.b16 %v321
    %v1169 = vunpack.c.l.b16 %v322
    %v1170 = vunpack.c.h.b16 %v322
    %v1171 = vunpack.c.l.b16 %v323
    %v1172 = vunpack.c.h.b16 %v323
    %v1173 = vunpack.c.l.b16 %v324
    %v1174 = vunpack.c.h.b16 %v324
    %v1175 = vunpack.c.l.b16 %v325
    %v1176 = vunpack.c.h.b16 %v325
    %v1177 = vunpack.c.l.b16 %v326
    %v1178 = vunpack.c.h.b16 %v326
    %v1179 = vunpack.c.l.b16 %v327
    %v1180 = vunpack.c.h.b16 %v327
    %v1181 = vunpack.c.l.b16 %v328
    %v1182 = vunpack.c.h.b16 %v328
    %v1183 = vunpack.c.l.b16 %v329
    %v1184 = vunpack.c.h.b16 %v329
    %v1185 = vunpack.c.l.b16 %v330
    %v1186 = vunpack.c.h.b16 %v330
    %v1187 = vunpack.c.l.b16 %v331
    %v1188 = vunpack.c.h.b16 %v331
    %v1189 = vunpack.c.l.b16 %v332
    %v1190 = vunpack.c.h.b16 %v332
    %v1191 = vunpack.c.l.b16 %v333
    %v1192 = vunpack.c.h.b16 %v333
    %v1193 = vunpack.c.l.b16 %v334
    %v1194 = vunpack.c.h.b16 %v334
    %v1195 = vunpack.c.l.b16 %v335
    %v1196 = vunpack.c.h.b16 %v335
    %v1197 = vunpack.c.l.b16 %v336
    %v1198 = vunpack.c.h.b16 %v336
    %v1199 = vunpack.c.l.b16 %v337
    %v1200 = vunpack.c.h.b16 %v337
    %v1201 = vunpack.c.l.b16 %v338
    %v1202 = vunpack.c.h.b16 %v338
    %v1203 = vunpack.c.l.b16 %v339
    %v1204 = vunpack.c.h.b16 %v339
    %v1205 = vunpack.c.l.b16 %v340
    %v1206 = vunpack.c.h.b16 %v340
    %v1207 = vunpack.c.l.b16 %v341
    %v1208 = vunpack.c.h.b16 %v341
    %v1209 = vunpack.c.l.b16 %v342
    %v1210 = vunpack.c.h.b16 %v342
    %v1211 = vunpack.c.l.b16 %v343
    %v1212 = vunpack.c.h.b16 %v343
    %v1213 = vunpack.c.l.b16 %v344
    %v1214 = vunpack.c.h.b16 %v344
    %v1215 = vunpack.c.l.b16 %v345
    %v1216 = vunpack.c.h.b16 %v345
    %v1217 = vunpack.c.l.b16 %v346
    %v1218 = vunpack.c.h.b16 %v346
    %v1219 = vunpack.c.l.b16 %v347
    %v1220 = vunpack.c.h.b16 %v347
    %v1221 = vunpack.c.l.b16 %v348
    %v1222 = vunpack.c.h.b16 %v348
    %v1223 = vunpack.c.l.b16 %v349
    %v1224 = vunpack.c.h.b16 %v349
    %v1225 = vunpack.c.l.b16 %v350
    %v1226 = vunpack.c.h.b16 %v350
    %v1227 = vunpack.c.l.b16 %v351
    %v1228 = vunpack.c.h.b16 %v351
    %v1229 = vunpack.c.l.b16 %v352
    %v1230 = vunpack.c.h.b16 %v352
    %v1231 = vunpack.c.l.b16 %v353
    %v1232 = vunpack.c.h.b16 %v353
    %v1233 = vunpack.c.l.b16 %v354
    %v1234 = vunpack.c.h.b16 %v354
    %v1235 = vunpack.c.l.b16 %v355
    %v1236 = vunpack.c.h.b16 %v355
    %v1237 = vunpack.c.l.b16 %v356
    %v1238 = vunpack.c.h.b16 %v356
    %v1239 = vunpack.c.l.b16 %v357
    %v1240 = vunpack.c.h.b16 %v357
    %v1241 = vunpack.c.l.b16 %v358
    %v1242 = vunpack.c.h.b16 %v358
    %v1243 = vunpack.c.l.b16 %v359
    %v1244 = vunpack.c.h.b16 %v359
    %v1245 = vunpack.c.l.b16 %v360
    %v1246 = vunpack.c.h.b16 %v360
    %v1247 = vunpack.c.l.b16 %v361
    %v1248 = vunpack.c.h.b16 %v361
    %v1249 = vunpack.c.l.b16 %v362
    %v1250 = vunpack.c.h.b16 %v362
    %v1251 = vunpack.c.l.b16 %v363
    %v1252 = vunpack.c.h.b16 %v363
    %v1253 = vunpack.c.l.b16 %v364
    %v1254 = vunpack.c.h.b16 %v364
    %v1255 = vunpack.c.l.b16 %v365
    %v1256 = vunpack.c.h.b16 %v365
    %v1257 = vunpack.c.l.b16 %v366
    %v1258 = vunpack.c.h.b16 %v366
    %v1259 = vunpack.c.l.b16 %v367
    %v1260 = vunpack.c.h.b16 %v367
    %v1261 = vunpack.c.l.b16 %v368
    %v1262 = vunpack.c.h.b16 %v368
    %v1263 = vunpack.c.l.b16 %v369
    %v1264 = vunpack.c.h.b16 %v369
    %v1265 = vunpack.c.l.b16 %v370
    %v1266 = vunpack.c.h.b16 %v370
    %v1267 = vunpack.c.l.b16 %v371
    %v1268 = vunpack.c.h.b16 %v371
    %v1269 = vunpack.c.l.b16 %v372
    %v1270 = vunpack.c.h.b16 %v372
    %v1271 = vunpack.c.l.b16 %v373
    %v1272 = vunpack.c.h.b16 %v373
    %v1273 = vunpack.c.l.b16 %v374
    %v1274 = vunpack.c.h.b16 %v374
    %v1275 = vunpack.c.l.b16 %v375
    %v1276 = vunpack.c.h.b16 %v375
    %v1277 = vunpack.c.l.b16 %v376
    %v1278 = vunpack.c.h.b16 %v376
    %v1279 = vunpack.c.l.b16 %v377
    %v1280 = vunpack.c.h.b16 %v377
    %v1281 = vunpack.c.l.b16 %v378
    %v1282 = vunpack.c.h.b16 %v378
    %v1283 = vunpack.c.l.b16 %v379
    %v1284 = vunpack.c.h.b16 %v379
    %v1285 = vunpack.c.l.b16 %v380
    %v1286 = vunpack.c.h.b16 %v380
    %v1287 = vunpack.c.l.b16 %v381
    %v1288 = vunpack.c.h.b16 %v381
    %v1289 = vunpack.c.l.b16 %v382
    %v1290 = vunpack.c.h.b16 %v382
    %v1291 = vunpack.c.l.b16 %v383
    %v1292 = vunpack.c.h.b16 %v383
    %v1293 = vunpack.c.l.b16 %v384
    %v1294 = vunpack.c.h.b16 %v384
    %v1295 = vunpack.c.l.b16 %v385
    %v1296 = vunpack.c.h.b16 %v385
    %v1297 = vunpack.c.l.b16 %v386
    %v1298 = vunpack.c.h.b16 %v386
    %v1299 = vunpack.c.l.b16 %v387
    %v1300 = vunpack.c.h.b16 %v387
    %v1301 = vunpack.c.l.b16 %v388
    %v1302 = vunpack.c.h.b16 %v388
    %v1303 = vunpack.c.l.b16 %v389
    %v1304 = vunpack.c.h.b16 %v389
    %v1305 = vunpack.c.l.b16 %v390
    %v1306 = vunpack.c.h.b16 %v390
    %v1307 = vunpack.c.l.b16 %v391
    %v1308 = vunpack.c.h.b16 %v391
    %v1309 = vunpack.c.l.b16 %v392
    %v1310 = vunpack.c.h.b16 %v392
    %v1311 = vunpack.c.l.b16 %v393
    %v1312 = vunpack.c.h.b16 %v393
    %v1313 = vunpack.c.l.b16 %v394
    %v1314 = vunpack.c.h.b16 %v394
    %v1315 = vunpack.c.l.b16 %v395
    %v1316 = vunpack.c.h.b16 %v395
    %v1317 = vunpack.c.l.b16 %v396
    %v1318 = vunpack.c.h.b16 %v396
    %v1319 = vunpack.c.l.b16 %v397
    %v1320 = vunpack.c.h.b16 %v397
    %v1321 = vunpack.c.l.b16 %v398
    %v1322 = vunpack.c.h.b16 %v398
    %v1323 = vunpack.c.l.b16 %v399
    %v1324 = vunpack.c.h.b16 %v399
    %v1325 = vunpack.c.l.b16 %v400
    %v1326 = vunpack.c.h.b16 %v400
    %v1327 = vpack.c.b16 %v757, %v751
    %v1328 = vpack.c.b16 %v758, %v752
    %v1329 = vpack.c.b16 %v759, %v753
    %v1330 = vpack.c.b16 %v760, %v754
    %v1331 = vpack.c.b16 %v761, %v755
    %v1332 = vpack.c.b16 %v762, %v756
    %v1333 = vpack.c.b16 %v769, %v763
    %v1334 = vpack.c.b16 %v770, %v764
    %v1335 = vpack.c.b16 %v771, %v765
    %v1336 = vpack.c.b16 %v772, %v766
    %v1337 = vpack.c.b16 %v773, %v767
    %v1338 = vpack.c.b16 %v774, %v768
    %v1339 = vpack.c.b16 %v781, %v775
    %v1340 = vpack.c.b16 %v782, %v776
    %v1341 = vpack.c.b16 %v783, %v777
    %v1342 = vpack.c.b16 %v784, %v778
    %v1343 = vpack.c.b16 %v785, %v779
    %v1344 = vpack.c.b16 %v786, %v780
    %v1345 = vpack.c.b16 %v793, %v787
    %v1346 = vpack.c.b16 %v794, %v788
    %v1347 = vpack.c.b16 %v795, %v789
    %v1348 = vpack.c.b16 %v796, %v790
    %v1349 = vpack.c.b16 %v797, %v791
    %v1350 = vpack.c.b16 %v798, %v792
    %v1351 = vpack.c.b16 %v805, %v799
    %v1352 = vpack.c.b16 %v806, %v800
    %v1353 = vpack.c.b16 %v807, %v801
    %v1354 = vpack.c.b16 %v808, %v802
    %v1355 = vpack.c.b16 %v809, %v803
    %v1356 = vpack.c.b16 %v810, %v804
    %v1357 = vpack.c.b16 %v817, %v811
    %v1358 = vpack.c.b16 %v818, %v812
    %v1359 = vpack.c.b16 %v819, %v813
    %v1360 = vpack.c.b16 %v820, %v814
    %v1361 = vpack.c.b16 %v821, %v815
    %v1362 = vpack.c.b16 %v822, %v816
    %v1363 = vpack.c.b16 %v829, %v823
    %v1364 = vpack.c.b16 %v830, %v824
    %v1365 = vpack.c.b16 %v831, %v825
    %v1366 = vpack.c.b16 %v832, %v826
    %v1367 = vpack.c.b16 %v833, %v827
    %v1368 = vpack.c.b16 %v834, %v828
    %v1369 = vpack.c.b16 %v841, %v835
    %v1370 = vpack.c.b16 %v842, %v836
    %v1371 = vpack.c.b16 %v843, %v837
    %v1372 = vpack.c.b16 %v844, %v838
    %v1373 = vpack.c.b16 %v845, %v839
    %v1374 = vpack.c.b16 %v846, %v840
    %v1375 = vpack.c.b16 %v853, %v847
    %v1376 = vpack.c.b16 %v854, %v848
    %v1377 = vpack.c.b16 %v855, %v849
    %v1378 = vpack.c.b16 %v856, %v850
    %v1379 = vpack.c.b16 %v857, %v851
    %v1380 = vpack.c.b16 %v858, %v852
    %v1381 = vpack.c.b16 %v865, %v859
    %v1382 = vpack.c.b16 %v866, %v860
    %v1383 = vpack.c.b16 %v867, %v861
    %v1384 = vpack.c.b16 %v868, %v862
    %v1385 = vpack.c.b16 %v869, %v863
    %v1386 = vpack.c.b16 %v870, %v864
    %v1387 = vpack.c.b16 %v877, %v871
    %v1388 = vpack.c.b16 %v878, %v872
    %v1389 = vpack.c.b16 %v879, %v873
    %v1390 = vpack.c.b16 %v880, %v874
    %v1391 = vpack.c.b16 %v881, %v875
    %v1392 = vpack.c.b16 %v882, %v876
    %v1393 = vpack.c.b16 %v889, %v883
    %v1394 = vpack.c.b16 %v890, %v884
    %v1395 = vpack.c.b16 %v891, %v885
    %v1396 = vpack.c.b16 %v892, %v886
    %v1397 = vpack.c.b16 %v893, %v887
    %v1398 = vpack.c.b16 %v894, %v888
    %v1399 = vpack.c.b16 %v901, %v895
    %v1400 = vpack.c.b16 %v902, %v896
    %v1401 = vpack.c.b16 %v903, %v897
    %v1402 = vpack.c.b16 %v904, %v898
    %v1403 = vpack.c.b16 %v905, %v899
    %v1404 = vpack.c.b16 %v906, %v900
    %v1405 = vpack.c.b16 %v913, %v907
    %v1406 = vpack.c.b16 %v914, %v908
    %v1407 = vpack.c.b16 %v915, %v909
    %v1408 = vpack.c.b16 %v916, %v910
    %v1409 = vpack.c.b16 %v917, %v911
    %v1410 = vpack.c.b16 %v918, %v912
    %v1411 = vpack.c.b16 %v925, %v919
    %v1412 = vpack.c.b16 %v926, %v920
    %v1413 = vpack.c.b16 %v927, %v921
    %v1414 = vpack.c.b16 %v928, %v922
    %v1415 = vpack.c.b16 %v929, %v923
    %v1416 = vpack.c.b16 %v930, %v924
    %v1417 = vpack.c.b16 %v937, %v931
    %v1418 = vpack.c.b16 %v938, %v932
    %v1419 = vpack.c.b16 %v939, %v933
    %v1420 = vpack.c.b16 %v940, %v934
    %v1421 = vpack.c.b16 %v941, %v935
    %v1422 = vpack.c.b16 %v942, %v936
    %v1423 = vpack.c.b16 %v949, %v943
    %v1424 = vpack.c.b16 %v950, %v944
    %v1425 = vpack.c.b16 %v951, %v945
    %v1426 = vpack.c.b16 %v952, %v946
    %v1427 = vpack.c.b16 %v953, %v947
    %v1428 = vpack.c.b16 %v954, %v948
    %v1429 = vpack.c.b16 %v961, %v955
    %v1430 = vpack.c.b16 %v962, %v956
    %v1431 = vpack.c.b16 %v963, %v957
    %v1432 = vpack.c.b16 %v964, %v958
    %v1433 = vpack.c.b16 %v965, %v959
    %v1434 = vpack.c.b16 %v966, %v960
    %v1435 = vpack.c.b16 %v973, %v967
    %v1436 = vpack.c.b16 %v974, %v968
    %v1437 = vpack.c.b16 %v975, %v969
    %v1438 = vpack.c.b16 %v976, %v970
    %v1439 = vpack.c.b16 %v977, %v971
    %v1440 = vpack.c.b16 %v978, %v972
    %v1441 = vpack.c.b16 %v985, %v979
    %v1442 = vpack.c.b16 %v986, %v980
    %v1443 = vpack.c.b16 %v987, %v981
    %v1444 = vpack.c.b16 %v988, %v982
    %v1445 = vpack.c.b16 %v989, %v983
    %v1446 = vpack.c.b16 %v990, %v984
    %v1447 = vpack.c.b16 %v997, %v991
    %v1448 = vpack.c.b16 %v998, %v992
    %v1449 = vpack.c.b16 %v999, %v993
    %v1450 = vpack.c.b16 %v1000, %v994
    %v1451 = vpack.c.b16 %v1001, %v995
    %v1452 = vpack.c.b16 %v1002, %v996
    %v1453 = vpack.c.b16 %v1009, %v1003
    %v1454 = vpack.c.b16 %v1010, %v1004
    %v1455 = vpack.c.b16 %v1011, %v1005
    %v1456 = vpack.c.b16 %v1012, %v1006
    %v1457 = vpack.c.b16 %v1013, %v1007
    %v1458 = vpack.c.b16 %v1014, %v1008
    %v1459 = vpack.c.b16 %v1021, %v1015
    %v1460 = vpack.c.b16 %v1022, %v1016
    %v1461 = vpack.c.b16 %v1023, %v1017
    %v1462 = vpack.c.b16 %v1024, %v1018
    %v1463 = vpack.c.b16 %v1025, %v1019
    %v1464 = vpack.c.b16 %v1026, %v1020
    %v1465 = vpack.c.b16 %v1033, %v1027
    %v1466 = vpack.c.b16 %v1034, %v1028
    %v1467 = vpack.c.b16 %v1035, %v1029
    %v1468 = vpack.c.b16 %v1036, %v1030
    %v1469 = vpack.c.b16 %v1037, %v1031
    %v1470 = vpack.c.b16 %v1038, %v1032
    %v1471 = vpack.c.b16 %v1045, %v1039
    %v1472 = vpack.c.b16 %v1046, %v1040
    %v1473 = vpack.c.b16 %v1047, %v1041
    %v1474 = vpack.c.b16 %v1048, %v1042
    %v1475 = vpack.c.b16 %v1049, %v1043
    %v1476 = vpack.c.b16 %v1050, %v1044
    %v1477 = vpack.c.b16 %v1057, %v1051
    %v1478 = vpack.c.b16 %v1058, %v1052
    %v1479 = vpack.c.b16 %v1059, %v1053
    %v1480 = vpack.c.b16 %v1060, %v1054
    %v1481 = vpack.c.b16 %v1061, %v1055
    %v1482 = vpack.c.b16 %v1062, %v1056
    %v1483 = vpack.c.b16 %v1069, %v1063
    %v1484 = vpack.c.b16 %v1070, %v1064
    %v1485 = vpack.c.b16 %v1071, %v1065
    %v1486 = vpack.c.b16 %v1072, %v1066
    %v1487 = vpack.c.b16 %v1073, %v1067
    %v1488 = vpack.c.b16 %v1074, %v1068
    %v1489 = vpack.c.b16 %v1081, %v1075
    %v1490 = vpack.c.b16 %v1082, %v1076
    %v1491 = vpack.c.b16 %v1083, %v1077
    %v1492 = vpack.c.b16 %v1084, %v1078
    %v1493 = vpack.c.b16 %v1085, %v1079
    %v1494 = vpack.c.b16 %v1086, %v1080
    %v1495 = vpack.c.b16 %v1093, %v1087
    %v1496 = vpack.c.b16 %v1094, %v1088
    %v1497 = vpack.c.b16 %v1095, %v1089
    %v1498 = vpack.c.b16 %v1096, %v1090
    %v1499 = vpack.c.b16 %v1097, %v1091
    %v1500 = vpack.c.b16 %v1098, %v1092
    %v1501 = vpack.c.b16 %v1105, %v1099
    %v1502 = vpack.c.b16 %v1106, %v1100
    %v1503 = vpack.c.b16 %v1107, %v1101
    %v1504 = vpack.c.b16 %v1108, %v1102
    %v1505 = vpack.c.b16 %v1109, %v1103
    %v1506 = vpack.c.b16 %v1110, %v1104
    %v1507 = vpack.c.b16 %v1117, %v1111
    %v1508 = vpack.c.b16 %v1118, %v1112
    %v1509 = vpack.c.b16 %v1119, %v1113
    %v1510 = vpack.c.b16 %v1120, %v1114
    %v1511 = vpack.c.b16 %v1121, %v1115
    %v1512 = vpack.c.b16 %v1122, %v1116
    %v1513 = vpack.c.b16 %v1129, %v1123
    %v1514 = vpack.c.b16 %v1130, %v1124
    %v1515 = vpack.c.b16 %v1131, %v1125
    %v1516 = vpack.c.b16 %v1132, %v1126
    %v1517 = vpack.c.b16 %v1133, %v1127
    %v1518 = vpack.c.b16 %v1134, %v1128
    %v1519 = vpack.c.b16 %v1141, %v1135
    %v1520 = vpack.c.b16 %v1142, %v1136
    %v1521 = vpack.c.b16 %v1143, %v1137
    %v1522 = vpack.c.b16 %v1144, %v1138
    %v1523 = vpack.c.b16 %v1145, %v1139
    %v1524 = vpack.c.b16 %v1146, %v1140
    %v1525 = vpack.c.b16 %v1153, %v1147
    %v1526 = vpack.c.b16 %v1154, %v1148
    %v1527 = vpack.c.b16 %v1155, %v1149
    %v1528 = vpack.c.b16 %v1156, %v1150
    %v1529 = vpack.c.b16 %v1157, %v1151
    %v1530 = vpack.c.b16 %v1158, %v1152
    %v1531 = vpack.c.b16 %v1165, %v1159
    %v1532 = vpack.c.b16 %v1166, %v1160
    %v1533 = vpack.c.b16 %v1167, %v1161
    %v1534 = vpack.c.b16 %v1168, %v1162
    %v1535 = vpack.c.b16 %v1169, %v1163
    %v1536 = vpack.c.b16 %v1170, %v1164
    %v1537 = vpack.c.b16 %v1177, %v1171
    %v1538 = vpack.c.b16 %v1178, %v1172
    %v1539 = vpack.c.b16 %v1179, %v1173
    %v1540 = vpack.c.b16 %v1180, %v1174
    %v1541 = vpack.c.b16 %v1181, %v1175
    %v1542 = vpack.c.b16 %v1182, %v1176
    %v1543 = vpack.c.b16 %v1189, %v1183
    %v1544 = vpack.c.b16 %v1190, %v1184
    %v1545 = vpack.c.b16 %v1191, %v1185
    %v1546 = vpack.c.b16 %v1192, %v1186
    %v1547 = vpack.c.b16 %v1193, %v1187
    %v1548 = vpack.c.b16 %v1194, %v1188
    %v1549 = vpack.c.b16 %v1201, %v1195
    %v1550 = vpack.c.b16 %v1202, %v1196
    %v1551 = vpack.c.b16 %v1203, %v1197
    %v1552 = vpack.c.b16 %v1204, %v1198
    %v1553 = vpack.c.b16 %v1205, %v1199
    %v1554 = vpack.c.b16 %v1206, %v1200
    %v1555 = vpack.c.b16 %v1213, %v1207
    %v1556 = vpack.c.b16 %v1214, %v1208
    %v1557 = vpack.c.b16 %v1215, %v1209
    %v1558 = vpack.c.b16 %v1216, %v1210
    %v1559 = vpack.c.b16 %v1217, %v1211
    %v1560 = vpack.c.b16 %v1218, %v1212
    %v1561 = vpack.c.b16 %v1225, %v1219
    %v1562 = vpack.c.b16 %v1226, %v1220
    %v1563 = vpack.c.b16 %v1227, %v1221
    %v1564 = vpack.c.b16 %v1228, %v1222
    %v1565 = vpack.c.b16 %v1229, %v1223
    %v1566 = vpack.c.b16 %v1230, %v1224
    %v1567 = vpack.c.b16 %v1237, %v1231
    %v1568 = vpack.c.b16 %v1238, %v1232
    %v1569 = vpack.c.b16 %v1239, %v1233
    %v1570 = vpack.c.b16 %v1240, %v1234
    %v1571 = vpack.c.b16 %v1241, %v1235
    %v1572 = vpack.c.b16 %v1242, %v1236
    %v1573 = vpack.c.b16 %v1249, %v1243
    %v1574 = vpack.c.b16 %v1250, %v1244
    %v1575 = vpack.c.b16 %v1251, %v1245
    %v1576 = vpack.c.b16 %v1252, %v1246
    %v1577 = vpack.c.b16 %v1253, %v1247
    %v1578 = vpack.c.b16 %v1254, %v1248
    %v1579 = vpack.c.b16 %v1261, %v1255
    %v1580 = vpack.c.b16 %v1262, %v1256
    %v1581 = vpack.c.b16 %v1263, %v1257
    %v1582 = vpack.c.b16 %v1264, %v1258
    %v1583 = vpack.c.b16 %v1265, %v1259
    %v1584 = vpack.c.b16 %v1266, %v1260
    %v1585 = vpack.c.b16 %v1273, %v1267
    %v1586 = vpack.c.b16 %v1274, %v1268
    %v1587 = vpack.c.b16 %v1275, %v1269
    %v1588 = vpack.c.b16 %v1276, %v1270
    %v1589 = vpack.c.b16 %v1277, %v1271
    %v1590 = vpack.c.b16 %v1278, %v1272
    %v1591 = vpack.c.b16 %v1285, %v1279
    %v1592 = vpack.c.b16 %v1286, %v1280
    %v1593 = vpack.c.b16 %v1287, %v1281
    %v1594 = vpack.c.b16 %v1288, %v1282
    %v1595 = vpack.c.b16 %v1289, %v1283
    %v1596 = vpack.c.b16 %v1290, %v1284
    %v1597 = vpack.c.b16 %v1297, %v1291
    %v1598 = vpack.c.b16 %v1298, %v1292
    %v1599 = vpack.c.b16 %v1299, %v1293
    %v1600 = vpack.c.b16 %v1300, %v1294
    %v1601 = vpack.c.b16 %v1301, %v1295
    %v1602 = vpack.c.b16 %v1302, %v1296
    %v1603 = vpack.c.b16 %v1309, %v1303
    %v1604 = vpack.c.b16 %v1310, %v1304
    %v1605 = vpack.c.b16 %v1311, %v1305
    %v1606 = vpack.c.b16 %v1312, %v1306
    %v1607 = vpack.c.b16 %v1313, %v1307
    %v1608 = vpack.c.b16 %v1314, %v1308
    %v1609 = vpack.c.b16 %v1321, %v1315
    %v1610 = vpack.c.b16 %v1322, %v1316
    %v1611 = vpack.c.b16 %v1323, %v1317
    %v1612 = vpack.c.b16 %v1324, %v1318
    %v1613 = vpack.c.b16 %v1325, %v1319
    %v1614 = vpack.c.b16 %v1326, %v1320
    %1903 = vmatprep.subr.bf16.mxu0 %v1328
    %1904 = vmatpush1.bf16.msra.mxu0 %v1327
    %1905 = vmatprep.subr.bf16.mxu0 %v1334
    %1906 = vmatpush1.bf16.msra.mxu0 %v1333
    %1907 = vmatprep.subr.bf16.mxu0 %v1340
    %1908 = vmatpush1.bf16.msra.mxu0 %v1339
    %1909 = vmatprep.subr.bf16.mxu0 %v1346
    %1910 = vmatpush1.bf16.msra.mxu0 %v1345
    %1911 = vmatprep.subr.bf16.mxu0 %v1352
    %1912 = vmatpush1.bf16.msra.mxu0 %v1351
    %1913 = vmatprep.subr.bf16.mxu0 %v1358
    %1914 = vmatpush1.bf16.msra.mxu0 %v1357
    %1915 = vmatprep.subr.bf16.mxu0 %v1364
    %1916 = vmatpush1.bf16.msra.mxu0 %v1363
    %1917 = vmatprep.subr.bf16.mxu0 %v1370
    %1918 = vmatpush1.bf16.msra.mxu0 %v1369
    %1919 = vmatprep.subr.bf16.mxu0 %v1376
    %1920 = vmatpush1.bf16.msra.mxu0 %v1375
    %1921 = vmatprep.subr.bf16.mxu0 %v1382
    %1922 = vmatpush1.bf16.msra.mxu0 %v1381
    %1923 = vmatprep.subr.bf16.mxu0 %v1388
    %1924 = vmatpush1.bf16.msra.mxu0 %v1387
    %1925 = vmatprep.subr.bf16.mxu0 %v1394
    %1926 = vmatpush1.bf16.msra.mxu0 %v1393
    %1927 = vmatprep.subr.bf16.mxu0 %v1400
    %1928 = vmatpush1.bf16.msra.mxu0 %v1399
    %1929 = vmatprep.subr.bf16.mxu0 %v1406
    %1930 = vmatpush1.bf16.msra.mxu0 %v1405
    %1931 = vmatprep.subr.bf16.mxu0 %v1412
    %1932 = vmatpush1.bf16.msra.mxu0 %v1411
    %1933 = vmatprep.subr.bf16.mxu0 %v1418
    %1934 = vmatpush1.bf16.msra.mxu0 %v1417
    %1935 = vmatprep.mubr.bf16.mxu0 %v452
    %1936 = vmatmul.mubr.bf16.gmra.mrb[0].mxu0 %v451
    %v1937 = vpop.f32.mrb[0].mxu0
    %v1938 = vadd.f32 %v406, %v1937
    %v1939 = vpop.f32.mrb[0].mxu0
    %v1940 = vadd.f32 %v410, %v1939
    %v1941 = vpop.f32.mrb[0].mxu0
    %v1942 = vadd.f32 %v406, %v1941
    %v1943 = vpop.f32.mrb[0].mxu0
    %v1944 = vadd.f32 %v410, %v1943
    %1945 = vdwg.mxu0
    %1946 = vmatprep.subr.bf16.mxu0 %v1424
    %1947 = vmatpush1.bf16.msra.mxu0 %v1423
    %1948 = vmatprep.subr.bf16.mxu0 %v1430
    %1949 = vmatpush1.bf16.msra.mxu0 %v1429
    %1950 = vmatprep.subr.bf16.mxu0 %v1436
    %1951 = vmatpush1.bf16.msra.mxu0 %v1435
    %1952 = vmatprep.subr.bf16.mxu0 %v1442
    %1953 = vmatpush1.bf16.msra.mxu0 %v1441
    %1954 = vmatprep.subr.bf16.mxu0 %v1448
    %1955 = vmatpush1.bf16.msra.mxu0 %v1447
    %1956 = vmatprep.subr.bf16.mxu0 %v1454
    %1957 = vmatpush1.bf16.msra.mxu0 %v1453
    %1958 = vmatprep.subr.bf16.mxu0 %v1460
    %1959 = vmatpush1.bf16.msra.mxu0 %v1459
    %1960 = vmatprep.subr.bf16.mxu0 %v1466
    %1961 = vmatpush1.bf16.msra.mxu0 %v1465
    %1962 = vmatprep.subr.bf16.mxu0 %v1472
    %1963 = vmatpush1.bf16.msra.mxu0 %v1471
    %1964 = vmatprep.subr.bf16.mxu0 %v1478
    %1965 = vmatpush1.bf16.msra.mxu0 %v1477
    %1966 = vmatprep.subr.bf16.mxu0 %v1484
    %1967 = vmatpush1.bf16.msra.mxu0 %v1483
    %1968 = vmatprep.subr.bf16.mxu0 %v1490
    %1969 = vmatpush1.bf16.msra.mxu0 %v1489
    %1970 = vmatprep.subr.bf16.mxu0 %v1496
    %1971 = vmatpush1.bf16.msra.mxu0 %v1495
    %1972 = vmatprep.subr.bf16.mxu0 %v1502
    %1973 = vmatpush1.bf16.msra.mxu0 %v1501
    %1974 = vmatprep.subr.bf16.mxu0 %v1508
    %1975 = vmatpush1.bf16.msra.mxu0 %v1507
    %1976 = vmatprep.subr.bf16.mxu0 %v1514
    %1977 = vmatpush1.bf16.msra.mxu0 %v1513
    %1978 = vmatprep.mubr.bf16.mxu0 %v454
    %1979 = vmatmul.mubr.bf16.gmra.mrb[0].mxu0 %v453
    %v1980 = vpop.f32.mrb[0].mxu0
    %v1981 = vadd.f32 %v1938, %v1980
    %v1982 = vpop.f32.mrb[0].mxu0
    %v1983 = vadd.f32 %v1940, %v1982
    %v1984 = vpop.f32.mrb[0].mxu0
    %v1985 = vadd.f32 %v1942, %v1984
    %v1986 = vpop.f32.mrb[0].mxu0
    %v1987 = vadd.f32 %v1944, %v1986
    %1988 = vdwg.mxu0
    %1989 = vmatprep.subr.bf16.mxu0 %v1520
    %1990 = vmatpush1.bf16.msra.mxu0 %v1519
    %1991 = vmatprep.subr.bf16.mxu0 %v1526
    %1992 = vmatpush1.bf16.msra.mxu0 %v1525
    %1993 = vmatprep.subr.bf16.mxu0 %v1532
    %1994 = vmatpush1.bf16.msra.mxu0 %v1531
    %1995 = vmatprep.subr.bf16.mxu0 %v1538
    %1996 = vmatpush1.bf16.msra.mxu0 %v1537
    %1997 = vmatprep.subr.bf16.mxu0 %v1544
    %1998 = vmatpush1.bf16.msra.mxu0 %v1543
    %1999 = vmatprep.subr.bf16.mxu0 %v1550
    %2000 = vmatpush1.bf16.msra.mxu0 %v1549
    %2001 = vmatprep.subr.bf16.mxu0 %v1556
    %2002 = vmatpush1.bf16.msra.mxu0 %v1555
    %2003 = vmatprep.subr.bf16.mxu0 %v1562
    %2004 = vmatpush1.bf16.msra.mxu0 %v1561
    %2005 = vmatprep.subr.bf16.mxu0 %v1568
    %2006 = vmatpush1.bf16.msra.mxu0 %v1567
    %2007 = vmatprep.subr.bf16.mxu0 %v1574
    %2008 = vmatpush1.bf16.msra.mxu0 %v1573
    %2009 = vmatprep.subr.bf16.mxu0 %v1580
    %2010 = vmatpush1.bf16.msra.mxu0 %v1579
    %2011 = vmatprep.subr.bf16.mxu0 %v1586
    %2012 = vmatpush1.bf16.msra.mxu0 %v1585
    %2013 = vmatprep.subr.bf16.mxu0 %v1592
    %2014 = vmatpush1.bf16.msra.mxu0 %v1591
    %2015 = vmatprep.subr.bf16.mxu0 %v1598
    %2016 = vmatpush1.bf16.msra.mxu0 %v1597
    %2017 = vmatprep.subr.bf16.mxu0 %v1604
    %2018 = vmatpush1.bf16.msra.mxu0 %v1603
    %2019 = vmatprep.subr.bf16.mxu0 %v1610
    %2020 = vmatpush1.bf16.msra.mxu0 %v1609
    %2021 = vmatprep.mubr.bf16.mxu0 %v456
    %2022 = vmatmul.mubr.bf16.gmra.mrb[0].mxu0 %v455
    %v2023 = vpop.f32.mrb[0].mxu0
    %v2024 = vadd.f32 %v1981, %v2023
    %v2025 = vpop.f32.mrb[0].mxu0
    %v2026 = vadd.f32 %v1983, %v2025
    %v2027 = vpop.f32.mrb[0].mxu0
    %v2028 = vadd.f32 %v1985, %v2027
    %v2029 = vpop.f32.mrb[0].mxu0
    %v2030 = vadd.f32 %v1987, %v2029
    %2031 = vdwg.mxu0
    %2032 = vmatprep.subr.bf16.mxu0 %v1330
    %2033 = vmatpush1.bf16.msra.mxu0 %v1329
    %2034 = vmatprep.subr.bf16.mxu0 %v1336
    %2035 = vmatpush1.bf16.msra.mxu0 %v1335
    %2036 = vmatprep.subr.bf16.mxu0 %v1342
    %2037 = vmatpush1.bf16.msra.mxu0 %v1341
    %2038 = vmatprep.subr.bf16.mxu0 %v1348
    %2039 = vmatpush1.bf16.msra.mxu0 %v1347
    %2040 = vmatprep.subr.bf16.mxu0 %v1354
    %2041 = vmatpush1.bf16.msra.mxu0 %v1353
    %2042 = vmatprep.subr.bf16.mxu0 %v1360
    %2043 = vmatpush1.bf16.msra.mxu0 %v1359
    %2044 = vmatprep.subr.bf16.mxu0 %v1366
    %2045 = vmatpush1.bf16.msra.mxu0 %v1365
    %2046 = vmatprep.subr.bf16.mxu0 %v1372
    %2047 = vmatpush1.bf16.msra.mxu0 %v1371
    %2048 = vmatprep.subr.bf16.mxu0 %v1378
    %2049 = vmatpush1.bf16.msra.mxu0 %v1377
    %2050 = vmatprep.subr.bf16.mxu0 %v1384
    %2051 = vmatpush1.bf16.msra.mxu0 %v1383
    %2052 = vmatprep.subr.bf16.mxu0 %v1390
    %2053 = vmatpush1.bf16.msra.mxu0 %v1389
    %2054 = vmatprep.subr.bf16.mxu0 %v1396
    %2055 = vmatpush1.bf16.msra.mxu0 %v1395
    %2056 = vmatprep.subr.bf16.mxu0 %v1402
    %2057 = vmatpush1.bf16.msra.mxu0 %v1401
    %2058 = vmatprep.subr.bf16.mxu0 %v1408
    %2059 = vmatpush1.bf16.msra.mxu0 %v1407
    %2060 = vmatprep.subr.bf16.mxu0 %v1414
    %2061 = vmatpush1.bf16.msra.mxu0 %v1413
    %2062 = vmatprep.subr.bf16.mxu0 %v1420
    %2063 = vmatpush1.bf16.msra.mxu0 %v1419
    %2064 = vmatprep.mubr.bf16.mxu0 %v452
    %2065 = vmatmul.mubr.bf16.gmra.mrb[0].mxu0 %v451
    %v2066 = vpop.f32.mrb[0].mxu0
    %v2067 = vadd.f32 %v414, %v2066
    %v2068 = vpop.f32.mrb[0].mxu0
    %v2069 = vadd.f32 %v418, %v2068
    %v2070 = vpop.f32.mrb[0].mxu0
    %v2071 = vadd.f32 %v414, %v2070
    %v2072 = vpop.f32.mrb[0].mxu0
    %v2073 = vadd.f32 %v418, %v2072
    %2074 = vdwg.mxu0
    %2075 = vmatprep.subr.bf16.mxu0 %v1426
    %2076 = vmatpush1.bf16.msra.mxu0 %v1425
    %2077 = vmatprep.subr.bf16.mxu0 %v1432
    %2078 = vmatpush1.bf16.msra.mxu0 %v1431
    %2079 = vmatprep.subr.bf16.mxu0 %v1438
    %2080 = vmatpush1.bf16.msra.mxu0 %v1437
    %2081 = vmatprep.subr.bf16.mxu0 %v1444
    %2082 = vmatpush1.bf16.msra.mxu0 %v1443
    %2083 = vmatprep.subr.bf16.mxu0 %v1450
    %2084 = vmatpush1.bf16.msra.mxu0 %v1449
    %2085 = vmatprep.subr.bf16.mxu0 %v1456
    %2086 = vmatpush1.bf16.msra.mxu0 %v1455
    %2087 = vmatprep.subr.bf16.mxu0 %v1462
    %2088 = vmatpush1.bf16.msra.mxu0 %v1461
    %2089 = vmatprep.subr.bf16.mxu0 %v1468
    %2090 = vmatpush1.bf16.msra.mxu0 %v1467
    %2091 = vmatprep.subr.bf16.mxu0 %v1474
    %2092 = vmatpush1.bf16.msra.mxu0 %v1473
    %2093 = vmatprep.subr.bf16.mxu0 %v1480
    %2094 = vmatpush1.bf16.msra.mxu0 %v1479
    %2095 = vmatprep.subr.bf16.mxu0 %v1486
    %2096 = vmatpush1.bf16.msra.mxu0 %v1485
    %2097 = vmatprep.subr.bf16.mxu0 %v1492
    %2098 = vmatpush1.bf16.msra.mxu0 %v1491
    %2099 = vmatprep.subr.bf16.mxu0 %v1498
    %2100 = vmatpush1.bf16.msra.mxu0 %v1497
    %2101 = vmatprep.subr.bf16.mxu0 %v1504
    %2102 = vmatpush1.bf16.msra.mxu0 %v1503
    %2103 = vmatprep.subr.bf16.mxu0 %v1510
    %2104 = vmatpush1.bf16.msra.mxu0 %v1509
    %2105 = vmatprep.subr.bf16.mxu0 %v1516
    %2106 = vmatpush1.bf16.msra.mxu0 %v1515
    %2107 = vmatprep.mubr.bf16.mxu0 %v454
    %2108 = vmatmul.mubr.bf16.gmra.mrb[0].mxu0 %v453
    %v2109 = vpop.f32.mrb[0].mxu0
    %v2110 = vadd.f32 %v2067, %v2109
    %v2111 = vpop.f32.mrb[0].mxu0
    %v2112 = vadd.f32 %v2069, %v2111
    %v2113 = vpop.f32.mrb[0].mxu0
    %v2114 = vadd.f32 %v2071, %v2113
    %v2115 = vpop.f32.mrb[0].mxu0
    %v2116 = vadd.f32 %v2073, %v2115
    %2117 = vdwg.mxu0
    %2118 = vmatprep.subr.bf16.mxu0 %v1522
    %2119 = vmatpush1.bf16.msra.mxu0 %v1521
    %2120 = vmatprep.subr.bf16.mxu0 %v1528
    %2121 = vmatpush1.bf16.msra.mxu0 %v1527
    %2122 = vmatprep.subr.bf16.mxu0 %v1534
    %2123 = vmatpush1.bf16.msra.mxu0 %v1533
    %2124 = vmatprep.subr.bf16.mxu0 %v1540
    %2125 = vmatpush1.bf16.msra.mxu0 %v1539
    %2126 = vmatprep.subr.bf16.mxu0 %v1546
    %2127 = vmatpush1.bf16.msra.mxu0 %v1545
    %2128 = vmatprep.subr.bf16.mxu0 %v1552
    %2129 = vmatpush1.bf16.msra.mxu0 %v1551
    %2130 = vmatprep.subr.bf16.mxu0 %v1558
    %2131 = vmatpush1.bf16.msra.mxu0 %v1557
    %2132 = vmatprep.subr.bf16.mxu0 %v1564
    %2133 = vmatpush1.bf16.msra.mxu0 %v1563
    %2134 = vmatprep.subr.bf16.mxu0 %v1570
    %2135 = vmatpush1.bf16.msra.mxu0 %v1569
    %2136 = vmatprep.subr.bf16.mxu0 %v1576
    %2137 = vmatpush1.bf16.msra.mxu0 %v1575
    %2138 = vmatprep.subr.bf16.mxu0 %v1582
    %2139 = vmatpush1.bf16.msra.mxu0 %v1581
    %2140 = vmatprep.subr.bf16.mxu0 %v1588
    %2141 = vmatpush1.bf16.msra.mxu0 %v1587
    %2142 = vmatprep.subr.bf16.mxu0 %v1594
    %2143 = vmatpush1.bf16.msra.mxu0 %v1593
    %2144 = vmatprep.subr.bf16.mxu0 %v1600
    %2145 = vmatpush1.bf16.msra.mxu0 %v1599
    %2146 = vmatprep.subr.bf16.mxu0 %v1606
    %2147 = vmatpush1.bf16.msra.mxu0 %v1605
    %2148 = vmatprep.subr.bf16.mxu0 %v1612
    %2149 = vmatpush1.bf16.msra.mxu0 %v1611
    %2150 = vmatprep.mubr.bf16.mxu0 %v456
    %2151 = vmatmul.mubr.bf16.gmra.mrb[0].mxu0 %v455
    %v2152 = vpop.f32.mrb[0].mxu0
    %v2153 = vadd.f32 %v2110, %v2152
    %v2154 = vpop.f32.mrb[0].mxu0
    %v2155 = vadd.f32 %v2112, %v2154
    %v2156 = vpop.f32.mrb[0].mxu0
    %v2157 = vadd.f32 %v2114, %v2156
    %v2158 = vpop.f32.mrb[0].mxu0
    %v2159 = vadd.f32 %v2116, %v2158
    %2160 = vdwg.mxu0
    %2161 = vmatprep.subr.bf16.mxu0 %v1332
    %2162 = vmatpush1.bf16.msra.mxu0 %v1331
    %2163 = vmatprep.subr.bf16.mxu0 %v1338
    %2164 = vmatpush1.bf16.msra.mxu0 %v1337
    %2165 = vmatprep.subr.bf16.mxu0 %v1344
    %2166 = vmatpush1.bf16.msra.mxu0 %v1343
    %2167 = vmatprep.subr.bf16.mxu0 %v1350
    %2168 = vmatpush1.bf16.msra.mxu0 %v1349
    %2169 = vmatprep.subr.bf16.mxu0 %v1356
    %2170 = vmatpush1.bf16.msra.mxu0 %v1355
    %2171 = vmatprep.subr.bf16.mxu0 %v1362
    %2172 = vmatpush1.bf16.msra.mxu0 %v1361
    %2173 = vmatprep.subr.bf16.mxu0 %v1368
    %2174 = vmatpush1.bf16.msra.mxu0 %v1367
    %2175 = vmatprep.subr.bf16.mxu0 %v1374
    %2176 = vmatpush1.bf16.msra.mxu0 %v1373
    %2177 = vmatprep.subr.bf16.mxu0 %v1380
    %2178 = vmatpush1.bf16.msra.mxu0 %v1379
    %2179 = vmatprep.subr.bf16.mxu0 %v1386
    %2180 = vmatpush1.bf16.msra.mxu0 %v1385
    %2181 = vmatprep.subr.bf16.mxu0 %v1392
    %2182 = vmatpush1.bf16.msra.mxu0 %v1391
    %2183 = vmatprep.subr.bf16.mxu0 %v1398
    %2184 = vmatpush1.bf16.msra.mxu0 %v1397
    %2185 = vmatprep.subr.bf16.mxu0 %v1404
    %2186 = vmatpush1.bf16.msra.mxu0 %v1403
    %2187 = vmatprep.subr.bf16.mxu0 %v1410
    %2188 = vmatpush1.bf16.msra.mxu0 %v1409
    %2189 = vmatprep.subr.bf16.mxu0 %v1416
    %2190 = vmatpush1.bf16.msra.mxu0 %v1415
    %2191 = vmatprep.subr.bf16.mxu0 %v1422
    %2192 = vmatpush1.bf16.msra.mxu0 %v1421
    %2193 = vmatprep.mubr.bf16.mxu0 %v452
    %2194 = vmatmul.mubr.bf16.gmra.mrb[0].mxu0 %v451
    %v2195 = vpop.f32.mrb[0].mxu0
    %v2196 = vadd.f32 %v422, %v2195
    %v2197 = vpop.f32.mrb[0].mxu0
    %v2198 = vadd.f32 %v426, %v2197
    %v2199 = vpop.f32.mrb[0].mxu0
    %v2200 = vadd.f32 %v422, %v2199
    %v2201 = vpop.f32.mrb[0].mxu0
    %v2202 = vadd.f32 %v426, %v2201
    %2203 = vdwg.mxu0
    %2204 = vmatprep.subr.bf16.mxu0 %v1428
    %2205 = vmatpush1.bf16.msra.mxu0 %v1427
    %2206 = vmatprep.subr.bf16.mxu0 %v1434
    %2207 = vmatpush1.bf16.msra.mxu0 %v1433
    %2208 = vmatprep.subr.bf16.mxu0 %v1440
    %2209 = vmatpush1.bf16.msra.mxu0 %v1439
    %2210 = vmatprep.subr.bf16.mxu0 %v1446
    %2211 = vmatpush1.bf16.msra.mxu0 %v1445
    %2212 = vmatprep.subr.bf16.mxu0 %v1452
    %2213 = vmatpush1.bf16.msra.mxu0 %v1451
    %2214 = vmatprep.subr.bf16.mxu0 %v1458
    %2215 = vmatpush1.bf16.msra.mxu0 %v1457
    %2216 = vmatprep.subr.bf16.mxu0 %v1464
    %2217 = vmatpush1.bf16.msra.mxu0 %v1463
    %2218 = vmatprep.subr.bf16.mxu0 %v1470
    %2219 = vmatpush1.bf16.msra.mxu0 %v1469
    %2220 = vmatprep.subr.bf16.mxu0 %v1476
    %2221 = vmatpush1.bf16.msra.mxu0 %v1475
    %2222 = vmatprep.subr.bf16.mxu0 %v1482
    %2223 = vmatpush1.bf16.msra.mxu0 %v1481
    %2224 = vmatprep.subr.bf16.mxu0 %v1488
    %2225 = vmatpush1.bf16.msra.mxu0 %v1487
    %2226 = vmatprep.subr.bf16.mxu0 %v1494
    %2227 = vmatpush1.bf16.msra.mxu0 %v1493
    %2228 = vmatprep.subr.bf16.mxu0 %v1500
    %2229 = vmatpush1.bf16.msra.mxu0 %v1499
    %2230 = vmatprep.subr.bf16.mxu0 %v1506
    %2231 = vmatpush1.bf16.msra.mxu0 %v1505
    %2232 = vmatprep.subr.bf16.mxu0 %v1512
    %2233 = vmatpush1.bf16.msra.mxu0 %v1511
    %2234 = vmatprep.subr.bf16.mxu0 %v1518
    %2235 = vmatpush1.bf16.msra.mxu0 %v1517
    %2236 = vmatprep.mubr.bf16.mxu0 %v454
    %2237 = vmatmul.mubr.bf16.gmra.mrb[0].mxu0 %v453
    %v2238 = vpop.f32.mrb[0].mxu0
    %v2239 = vadd.f32 %v2196, %v2238
    %v2240 = vpop.f32.mrb[0].mxu0
    %v2241 = vadd.f32 %v2198, %v2240
    %v2242 = vpop.f32.mrb[0].mxu0
    %v2243 = vadd.f32 %v2200, %v2242
    %v2244 = vpop.f32.mrb[0].mxu0
    %v2245 = vadd.f32 %v2202, %v2244
    %2246 = vdwg.mxu0
    %2247 = vmatprep.subr.bf16.mxu0 %v1524
    %2248 = vmatpush1.bf16.msra.mxu0 %v1523
    %2249 = vmatprep.subr.bf16.mxu0 %v1530
    %2250 = vmatpush1.bf16.msra.mxu0 %v1529
    %2251 = vmatprep.subr.bf16.mxu0 %v1536
    %2252 = vmatpush1.bf16.msra.mxu0 %v1535
    %2253 = vmatprep.subr.bf16.mxu0 %v1542
    %2254 = vmatpush1.bf16.msra.mxu0 %v1541
    %2255 = vmatprep.subr.bf16.mxu0 %v1548
    %2256 = vmatpush1.bf16.msra.mxu0 %v1547
    %2257 = vmatprep.subr.bf16.mxu0 %v1554
    %2258 = vmatpush1.bf16.msra.mxu0 %v1553
    %2259 = vmatprep.subr.bf16.mxu0 %v1560
    %2260 = vmatpush1.bf16.msra.mxu0 %v1559
    %2261 = vmatprep.subr.bf16.mxu0 %v1566
    %2262 = vmatpush1.bf16.msra.mxu0 %v1565
    %2263 = vmatprep.subr.bf16.mxu0 %v1572
    %2264 = vmatpush1.bf16.msra.mxu0 %v1571
    %2265 = vmatprep.subr.bf16.mxu0 %v1578
    %2266 = vmatpush1.bf16.msra.mxu0 %v1577
    %2267 = vmatprep.subr.bf16.mxu0 %v1584
    %2268 = vmatpush1.bf16.msra.mxu0 %v1583
    %2269 = vmatprep.subr.bf16.mxu0 %v1590
    %2270 = vmatpush1.bf16.msra.mxu0 %v1589
    %2271 = vmatprep.subr.bf16.mxu0 %v1596
    %2272 = vmatpush1.bf16.msra.mxu0 %v1595
    %2273 = vmatprep.subr.bf16.mxu0 %v1602
    %2274 = vmatpush1.bf16.msra.mxu0 %v1601
    %2275 = vmatprep.subr.bf16.mxu0 %v1608
    %2276 = vmatpush1.bf16.msra.mxu0 %v1607
    %2277 = vmatprep.subr.bf16.mxu0 %v1614
    %2278 = vmatpush1.bf16.msra.mxu0 %v1613
    %2279 = vmatprep.mubr.bf16.mxu0 %v456
    %2280 = vmatmul.mubr.bf16.gmra.mrb[0].mxu0 %v455
    %v2281 = vpop.f32.mrb[0].mxu0
    %v2282 = vadd.f32 %v2239, %v2281
    %v2283 = vpop.f32.mrb[0].mxu0
    %v2284 = vadd.f32 %v2241, %v2283
    %v2285 = vpop.f32.mrb[0].mxu0
    %v2286 = vadd.f32 %v2243, %v2285
    %v2287 = vpop.f32.mrb[0].mxu0
    %v2288 = vadd.f32 %v2245, %v2287
    %2289 = vdwg.mxu0
    %v2290 = vtanh.pop %v2024
    %v2291 = vtanh.pop %v2026
    %v2292 = vtanh.pop %v2153
    %v2293 = vtanh.pop %v2155
    %v2294 = vtanh.pop %v2282
    %v2295 = vtanh.pop %v2284
    %v2296 = vtanh.pop %v2028
    %v2297 = vtanh.pop %v2030
    %v2298 = vtanh.pop %v2157
    %v2299 = vtanh.pop %v2159
    %v2300 = vtanh.pop %v2286
    %v2301 = vtanh.pop %v2288
    %v2302 = vpack.c.bf16 %v2296, %v2290
    %v2303 = vpack.c.bf16 %v2297, %v2291
    %v2304 = vpack.c.bf16 %v2298, %v2292
    %v2305 = vpack.c.bf16 %v2299, %v2293
    %v2306 = vpack.c.bf16 %v2300, %v2294
    %v2307 = vpack.c.bf16 %v2301, %v2295
    %v2308 = vld [vmem:[#allocation9] sm:$0xf]
    %v2309 = vld [vmem:[#allocation9 + $0x4] sm:$0xf]
    %v2310 = vld [vmem:[#allocation9 + $0x8] sm:$0xf]
    %v2311 = vld [vmem:[#allocation9 + $0xc] sm:$0xf]
    %v2312 = vld [vmem:[#allocation9 + $0x10] sm:$0xf]
    %v2313 = vld [vmem:[#allocation9 + $0x14] sm:$0xf]
    %v2314 = vld [vmem:[#allocation9 + $0x18] sm:$0xf]
    %v2315 = vld [vmem:[#allocation9 + $0x1c] sm:$0xf]
    %v2316 = vld [vmem:[#allocation9 + $0x20] sm:$0xf]
    %v2317 = vld [vmem:[#allocation9 + $0x24] sm:$0xf]
    %v2318 = vld [vmem:[#allocation9 + $0x28] sm:$0xf]
    %v2319 = vld [vmem:[#allocation9 + $0x2c] sm:$0xf]
    %v2320 = vld [vmem:[#allocation9 + $0x30] sm:$0xf]
    %v2321 = vld [vmem:[#allocation9 + $0x34] sm:$0xf]
    %v2322 = vld [vmem:[#allocation9 + $0x38] sm:$0xf]
    %v2323 = vld [vmem:[#allocation9 + $0x3c] sm:$0xf]
    %v2324 = vld [vmem:[#allocation9 + $0x40] sm:$0xf]
    %v2325 = vld [vmem:[#allocation9 + $0x44] sm:$0xf]
    %v2326 = vld [vmem:[#allocation9 + $0x48] sm:$0xf]
    %v2327 = vld [vmem:[#allocation9 + $0x4c] sm:$0xf]
    %v2328 = vld [vmem:[#allocation9 + $0x50] sm:$0xf]
    %v2329 = vld [vmem:[#allocation9 + $0x54] sm:$0xf]
    %v2330 = vld [vmem:[#allocation9 + $0x58] sm:$0xf]
    %v2331 = vld [vmem:[#allocation9 + $0x5c] sm:$0xf]
    %v2332 = vld [vmem:[#allocation9 + $0x60] sm:$0xf]
    %v2333 = vld [vmem:[#allocation9 + $0x64] sm:$0xf]
    %v2334 = vld [vmem:[#allocation9 + $0x68] sm:$0xf]
    %v2335 = vld [vmem:[#allocation9 + $0x6c] sm:$0xf]
    %v2336 = vld [vmem:[#allocation9 + $0x70] sm:$0xf]
    %v2337 = vld [vmem:[#allocation9 + $0x74] sm:$0xf]
    %v2338 = vld [vmem:[#allocation9 + $0x78] sm:$0xf]
    %v2339 = vld [vmem:[#allocation9 + $0x7c] sm:$0xf]
    %v2340 = vld [vmem:[#allocation9 + $0x80] sm:$0xf]
    %v2341 = vld [vmem:[#allocation9 + $0x84] sm:$0xf]
    %v2342 = vld [vmem:[#allocation9 + $0x88] sm:$0xf]
    %v2343 = vld [vmem:[#allocation9 + $0x8c] sm:$0xf]
    %v2344 = vld [vmem:[#allocation9 + $0x90] sm:$0xf]
    %v2345 = vld [vmem:[#allocation9 + $0x94] sm:$0xf]
    %v2346 = vld [vmem:[#allocation9 + $0x98] sm:$0xf]
    %v2347 = vld [vmem:[#allocation9 + $0x9c] sm:$0xf]
    %v2348 = vld [vmem:[#allocation9 + $0xa0] sm:$0xf]
    %v2349 = vld [vmem:[#allocation9 + $0xa4] sm:$0xf]
    %v2350 = vld [vmem:[#allocation9 + $0xa8] sm:$0xf]
    %v2351 = vld [vmem:[#allocation9 + $0xac] sm:$0xf]
    %v2352 = vld [vmem:[#allocation9 + $0xb0] sm:$0xf]
    %v2353 = vld [vmem:[#allocation9 + $0xb4] sm:$0xf]
    %v2354 = vld [vmem:[#allocation9 + $0xb8] sm:$0xf]
    %v2355 = vld [vmem:[#allocation9 + $0xbc] sm:$0xf]
    %v2356 = vld [vmem:[#allocation9 + $0xc0] sm:$0xf]
    %v2357 = vld [vmem:[#allocation9 + $0xc4] sm:$0xf]
    %v2358 = vld [vmem:[#allocation9 + $0xc8] sm:$0xf]
    %v2359 = vld [vmem:[#allocation9 + $0xcc] sm:$0xf]
    %v2360 = vld [vmem:[#allocation9 + $0xd0] sm:$0xf]
    %v2361 = vld [vmem:[#allocation9 + $0xd4] sm:$0xf]
    %v2362 = vld [vmem:[#allocation9 + $0xd8] sm:$0xf]
    %v2363 = vld [vmem:[#allocation9 + $0xdc] sm:$0xf]
    %v2364 = vld [vmem:[#allocation9 + $0xe0] sm:$0xf]
    %v2365 = vld [vmem:[#allocation9 + $0xe4] sm:$0xf]
    %v2366 = vld [vmem:[#allocation9 + $0xe8] sm:$0xf]
    %v2367 = vld [vmem:[#allocation9 + $0xec] sm:$0xf]
    %v2368 = vld [vmem:[#allocation9 + $0xf0] sm:$0xf]
    %v2369 = vld [vmem:[#allocation9 + $0xf4] sm:$0xf]
    %v2370 = vld [vmem:[#allocation9 + $0xf8] sm:$0xf]
    %v2371 = vld [vmem:[#allocation9 + $0xfc] sm:$0xf]
    %v2372 = vld [vmem:[#allocation9 + $0x100] sm:$0xf]
    %v2373 = vld [vmem:[#allocation9 + $0x104] sm:$0xf]
    %v2374 = vld [vmem:[#allocation9 + $0x108] sm:$0xf]
    %v2375 = vld [vmem:[#allocation9 + $0x10c] sm:$0xf]
    %v2376 = vld [vmem:[#allocation9 + $0x110] sm:$0xf]
    %v2377 = vld [vmem:[#allocation9 + $0x114] sm:$0xf]
    %v2378 = vld [vmem:[#allocation9 + $0x118] sm:$0xf]
    %v2379 = vld [vmem:[#allocation9 + $0x11c] sm:$0xf]
    %v2380 = vld [vmem:[#allocation9 + $0x120] sm:$0xf]
    %v2381 = vld [vmem:[#allocation9 + $0x124] sm:$0xf]
    %v2382 = vld [vmem:[#allocation9 + $0x128] sm:$0xf]
    %v2383 = vld [vmem:[#allocation9 + $0x12c] sm:$0xf]
    %v2384 = vld [vmem:[#allocation9 + $0x130] sm:$0xf]
    %v2385 = vld [vmem:[#allocation9 + $0x134] sm:$0xf]
    %v2386 = vld [vmem:[#allocation9 + $0x138] sm:$0xf]
    %v2387 = vld [vmem:[#allocation9 + $0x13c] sm:$0xf]
    %v2388 = vld [vmem:[#allocation9 + $0x140] sm:$0xf]
    %v2389 = vld [vmem:[#allocation9 + $0x144] sm:$0xf]
    %v2390 = vld [vmem:[#allocation9 + $0x148] sm:$0xf]
    %v2391 = vld [vmem:[#allocation9 + $0x14c] sm:$0xf]
    %v2392 = vld [vmem:[#allocation9 + $0x150] sm:$0xf]
    %v2393 = vld [vmem:[#allocation9 + $0x154] sm:$0xf]
    %v2394 = vld [vmem:[#allocation9 + $0x158] sm:$0xf]
    %v2395 = vld [vmem:[#allocation9 + $0x15c] sm:$0xf]
    %v2396 = vld [vmem:[#allocation9 + $0x160] sm:$0xf]
    %v2397 = vld [vmem:[#allocation9 + $0x164] sm:$0xf]
    %v2398 = vld [vmem:[#allocation9 + $0x168] sm:$0xf]
    %v2399 = vld [vmem:[#allocation9 + $0x16c] sm:$0xf]
    %v2400 = vld [vmem:[#allocation9 + $0x170] sm:$0xf]
    %v2401 = vld [vmem:[#allocation9 + $0x174] sm:$0xf]
    %v2402 = vld [vmem:[#allocation9 + $0x178] sm:$0xf]
    %v2403 = vld [vmem:[#allocation9 + $0x17c] sm:$0xf]
    %v2404 = vld [vmem:[#allocation11] sm:$0x1]
    %v2406 = vlaneseq
    %v2407 = vshrl.u32 %v2406, 7
    %v2408 = vsub.s32 0, %v2407
    %v2409 = vrot.slane %v2404, %v2408
    %v2507 = vunpack.c.l.b16 %v2308
    %v2508 = vunpack.c.l.b16 %v2309
    %v2509 = vunpack.c.l.b16 %v2310
    %v2510 = vunpack.c.l.b16 %v2311
    %v2511 = vunpack.c.l.b16 %v2312
    %v2512 = vunpack.c.l.b16 %v2313
    %v2513 = vunpack.c.l.b16 %v2314
    %v2514 = vunpack.c.l.b16 %v2315
    %v2515 = vunpack.c.l.b16 %v2316
    %v2516 = vunpack.c.l.b16 %v2317
    %v2517 = vunpack.c.l.b16 %v2318
    %v2518 = vunpack.c.l.b16 %v2319
    %v2519 = vunpack.c.l.b16 %v2320
    %v2520 = vunpack.c.l.b16 %v2321
    %v2521 = vunpack.c.l.b16 %v2322
    %v2522 = vunpack.c.l.b16 %v2323
    %v2523 = vunpack.c.l.b16 %v2324
    %v2524 = vunpack.c.l.b16 %v2325
    %v2525 = vunpack.c.l.b16 %v2326
    %v2526 = vunpack.c.l.b16 %v2327
    %v2527 = vunpack.c.l.b16 %v2328
    %v2528 = vunpack.c.l.b16 %v2329
    %v2529 = vunpack.c.l.b16 %v2330
    %v2530 = vunpack.c.l.b16 %v2331
    %v2531 = vunpack.c.l.b16 %v2332
    %v2532 = vunpack.c.l.b16 %v2333
    %v2533 = vunpack.c.l.b16 %v2334
    %v2534 = vunpack.c.l.b16 %v2335
    %v2535 = vunpack.c.l.b16 %v2336
    %v2536 = vunpack.c.l.b16 %v2337
    %v2537 = vunpack.c.l.b16 %v2338
    %v2538 = vunpack.c.l.b16 %v2339
    %v2539 = vunpack.c.l.b16 %v2340
    %v2540 = vunpack.c.l.b16 %v2341
    %v2541 = vunpack.c.l.b16 %v2342
    %v2542 = vunpack.c.l.b16 %v2343
    %v2543 = vunpack.c.l.b16 %v2344
    %v2544 = vunpack.c.l.b16 %v2345
    %v2545 = vunpack.c.l.b16 %v2346
    %v2546 = vunpack.c.l.b16 %v2347
    %v2547 = vunpack.c.l.b16 %v2348
    %v2548 = vunpack.c.l.b16 %v2349
    %v2549 = vunpack.c.l.b16 %v2350
    %v2550 = vunpack.c.l.b16 %v2351
    %v2551 = vunpack.c.l.b16 %v2352
    %v2552 = vunpack.c.l.b16 %v2353
    %v2553 = vunpack.c.l.b16 %v2354
    %v2554 = vunpack.c.l.b16 %v2355
    %v2555 = vunpack.c.l.b16 %v2356
    %v2556 = vunpack.c.l.b16 %v2357
    %v2557 = vunpack.c.l.b16 %v2358
    %v2558 = vunpack.c.l.b16 %v2359
    %v2559 = vunpack.c.l.b16 %v2360
    %v2560 = vunpack.c.l.b16 %v2361
    %v2561 = vunpack.c.l.b16 %v2362
    %v2562 = vunpack.c.l.b16 %v2363
    %v2563 = vunpack.c.l.b16 %v2364
    %v2564 = vunpack.c.l.b16 %v2365
    %v2565 = vunpack.c.l.b16 %v2366
    %v2566 = vunpack.c.l.b16 %v2367
    %v2567 = vunpack.c.l.b16 %v2368
    %v2568 = vunpack.c.l.b16 %v2369
    %v2569 = vunpack.c.l.b16 %v2370
    %v2570 = vunpack.c.l.b16 %v2371
    %v2571 = vunpack.c.l.b16 %v2372
    %v2572 = vunpack.c.l.b16 %v2373
    %v2573 = vunpack.c.l.b16 %v2374
    %v2574 = vunpack.c.l.b16 %v2375
    %v2575 = vunpack.c.l.b16 %v2376
    %v2576 = vunpack.c.l.b16 %v2377
    %v2577 = vunpack.c.l.b16 %v2378
    %v2578 = vunpack.c.l.b16 %v2379
    %v2579 = vunpack.c.l.b16 %v2380
    %v2580 = vunpack.c.l.b16 %v2381
    %v2581 = vunpack.c.l.b16 %v2382
    %v2582 = vunpack.c.l.b16 %v2383
    %v2583 = vunpack.c.l.b16 %v2384
    %v2584 = vunpack.c.l.b16 %v2385
    %v2585 = vunpack.c.l.b16 %v2386
    %v2586 = vunpack.c.l.b16 %v2387
    %v2587 = vunpack.c.l.b16 %v2388
    %v2588 = vunpack.c.l.b16 %v2389
    %v2589 = vunpack.c.l.b16 %v2390
    %v2590 = vunpack.c.l.b16 %v2391
    %v2591 = vunpack.c.l.b16 %v2392
    %v2592 = vunpack.c.l.b16 %v2393
    %v2593 = vunpack.c.l.b16 %v2394
    %v2594 = vunpack.c.l.b16 %v2395
    %v2595 = vunpack.c.l.b16 %v2396
    %v2596 = vunpack.c.l.b16 %v2397
    %v2597 = vunpack.c.l.b16 %v2398
    %v2598 = vunpack.c.l.b16 %v2399
    %v2599 = vunpack.c.l.b16 %v2400
    %v2600 = vunpack.c.l.b16 %v2401
    %v2601 = vunpack.c.l.b16 %v2402
    %v2602 = vunpack.c.l.b16 %v2403
    %v2603 = vpack.c.b16 %v2508, %v2507
    %v2604 = vpack.c.b16 %v2510, %v2509
    %v2605 = vpack.c.b16 %v2512, %v2511
    %v2606 = vpack.c.b16 %v2514, %v2513
    %v2607 = vpack.c.b16 %v2516, %v2515
    %v2608 = vpack.c.b16 %v2518, %v2517
    %v2609 = vpack.c.b16 %v2520, %v2519
    %v2610 = vpack.c.b16 %v2522, %v2521
    %v2611 = vpack.c.b16 %v2524, %v2523
    %v2612 = vpack.c.b16 %v2526, %v2525
    %v2613 = vpack.c.b16 %v2528, %v2527
    %v2614 = vpack.c.b16 %v2530, %v2529
    %v2615 = vpack.c.b16 %v2532, %v2531
    %v2616 = vpack.c.b16 %v2534, %v2533
    %v2617 = vpack.c.b16 %v2536, %v2535
    %v2618 = vpack.c.b16 %v2538, %v2537
    %v2619 = vpack.c.b16 %v2540, %v2539
    %v2620 = vpack.c.b16 %v2542, %v2541
    %v2621 = vpack.c.b16 %v2544, %v2543
    %v2622 = vpack.c.b16 %v2546, %v2545
    %v2623 = vpack.c.b16 %v2548, %v2547
    %v2624 = vpack.c.b16 %v2550, %v2549
    %v2625 = vpack.c.b16 %v2552, %v2551
    %v2626 = vpack.c.b16 %v2554, %v2553
    %v2627 = vpack.c.b16 %v2556, %v2555
    %v2628 = vpack.c.b16 %v2558, %v2557
    %v2629 = vpack.c.b16 %v2560, %v2559
    %v2630 = vpack.c.b16 %v2562, %v2561
    %v2631 = vpack.c.b16 %v2564, %v2563
    %v2632 = vpack.c.b16 %v2566, %v2565
    %v2633 = vpack.c.b16 %v2568, %v2567
    %v2634 = vpack.c.b16 %v2570, %v2569
    %v2635 = vpack.c.b16 %v2572, %v2571
    %v2636 = vpack.c.b16 %v2574, %v2573
    %v2637 = vpack.c.b16 %v2576, %v2575
    %v2638 = vpack.c.b16 %v2578, %v2577
    %v2639 = vpack.c.b16 %v2580, %v2579
    %v2640 = vpack.c.b16 %v2582, %v2581
    %v2641 = vpack.c.b16 %v2584, %v2583
    %v2642 = vpack.c.b16 %v2586, %v2585
    %v2643 = vpack.c.b16 %v2588, %v2587
    %v2644 = vpack.c.b16 %v2590, %v2589
    %v2645 = vpack.c.b16 %v2592, %v2591
    %v2646 = vpack.c.b16 %v2594, %v2593
    %v2647 = vpack.c.b16 %v2596, %v2595
    %v2648 = vpack.c.b16 %v2598, %v2597
    %v2649 = vpack.c.b16 %v2600, %v2599
    %v2650 = vpack.c.b16 %v2602, %v2601
    %2699 = vmatprep.subr.bf16.mxu0 0
    %2700 = vmatpush1.bf16.msra.mxu0 %v2603
    %2701 = vmatprep.subr.bf16.mxu0 0
    %2702 = vmatpush1.bf16.msra.mxu0 %v2604
    %2703 = vmatprep.subr.bf16.mxu0 0
    %2704 = vmatpush1.bf16.msra.mxu0 %v2605
    %2705 = vmatprep.subr.bf16.mxu0 0
    %2706 = vmatpush1.bf16.msra.mxu0 %v2606
    %2707 = vmatprep.subr.bf16.mxu0 0
    %2708 = vmatpush1.bf16.msra.mxu0 %v2607
    %2709 = vmatprep.subr.bf16.mxu0 0
    %2710 = vmatpush1.bf16.msra.mxu0 %v2608
    %2711 = vmatprep.subr.bf16.mxu0 0
    %2712 = vmatpush1.bf16.msra.mxu0 %v2609
    %2713 = vmatprep.subr.bf16.mxu0 0
    %2714 = vmatpush1.bf16.msra.mxu0 %v2610
    %2715 = vmatprep.subr.bf16.mxu0 0
    %2716 = vmatpush1.bf16.msra.mxu0 %v2611
    %2717 = vmatprep.subr.bf16.mxu0 0
    %2718 = vmatpush1.bf16.msra.mxu0 %v2612
    %2719 = vmatprep.subr.bf16.mxu0 0
    %2720 = vmatpush1.bf16.msra.mxu0 %v2613
    %2721 = vmatprep.subr.bf16.mxu0 0
    %2722 = vmatpush1.bf16.msra.mxu0 %v2614
    %2723 = vmatprep.subr.bf16.mxu0 0
    %2724 = vmatpush1.bf16.msra.mxu0 %v2615
    %2725 = vmatprep.subr.bf16.mxu0 0
    %2726 = vmatpush1.bf16.msra.mxu0 %v2616
    %2727 = vmatprep.subr.bf16.mxu0 0
    %2728 = vmatpush1.bf16.msra.mxu0 %v2617
    %2729 = vmatprep.subr.bf16.mxu0 0
    %2730 = vmatpush1.bf16.msra.mxu0 %v2618
    %2731 = vmatprep.mubr.bf16.mxu0 %v2303
    %2732 = vmatmul.mubr.bf16.gmra.mrb[0].mxu0 %v2302
    %v2733 = vpop.f32.mrb[0].mxu0
    %v2734 = vadd.f32 %v2409, %v2733
    %v2735 = vpop.f32.mrb[0].mxu0
    %v2736 = vpop.f32.mrb[0].mxu0
    %v2737 = vadd.f32 %v2409, %v2736
    %v2738 = vpop.f32.mrb[0].mxu0
    %2739 = vdwg.mxu0
    %2740 = vmatprep.subr.bf16.mxu0 0
    %2741 = vmatpush1.bf16.msra.mxu0 %v2619
    %2742 = vmatprep.subr.bf16.mxu0 0
    %2743 = vmatpush1.bf16.msra.mxu0 %v2620
    %2744 = vmatprep.subr.bf16.mxu0 0
    %2745 = vmatpush1.bf16.msra.mxu0 %v2621
    %2746 = vmatprep.subr.bf16.mxu0 0
    %2747 = vmatpush1.bf16.msra.mxu0 %v2622
    %2748 = vmatprep.subr.bf16.mxu0 0
    %2749 = vmatpush1.bf16.msra.mxu0 %v2623
    %2750 = vmatprep.subr.bf16.mxu0 0
    %2751 = vmatpush1.bf16.msra.mxu0 %v2624
    %2752 = vmatprep.subr.bf16.mxu0 0
    %2753 = vmatpush1.bf16.msra.mxu0 %v2625
    %2754 = vmatprep.subr.bf16.mxu0 0
    %2755 = vmatpush1.bf16.msra.mxu0 %v2626
    %2756 = vmatprep.subr.bf16.mxu0 0
    %2757 = vmatpush1.bf16.msra.mxu0 %v2627
    %2758 = vmatprep.subr.bf16.mxu0 0
    %2759 = vmatpush1.bf16.msra.mxu0 %v2628
    %2760 = vmatprep.subr.bf16.mxu0 0
    %2761 = vmatpush1.bf16.msra.mxu0 %v2629
    %2762 = vmatprep.subr.bf16.mxu0 0
    %2763 = vmatpush1.bf16.msra.mxu0 %v2630
    %2764 = vmatprep.subr.bf16.mxu0 0
    %2765 = vmatpush1.bf16.msra.mxu0 %v2631
    %2766 = vmatprep.subr.bf16.mxu0 0
    %2767 = vmatpush1.bf16.msra.mxu0 %v2632
    %2768 = vmatprep.subr.bf16.mxu0 0
    %2769 = vmatpush1.bf16.msra.mxu0 %v2633
    %2770 = vmatprep.subr.bf16.mxu0 0
    %2771 = vmatpush1.bf16.msra.mxu0 %v2634
    %2772 = vmatprep.mubr.bf16.mxu0 %v2305
    %2773 = vmatmul.mubr.bf16.gmra.mrb[0].mxu0 %v2304
    %v2774 = vpop.f32.mrb[0].mxu0
    %v2775 = vadd.f32 %v2734, %v2774
    %v2776 = vpop.f32.mrb[0].mxu0
    %v2777 = vpop.f32.mrb[0].mxu0
    %v2778 = vadd.f32 %v2737, %v2777
    %v2779 = vpop.f32.mrb[0].mxu0
    %2780 = vdwg.mxu0
    %2781 = vmatprep.subr.bf16.mxu0 0
    %2782 = vmatpush1.bf16.msra.mxu0 %v2635
    %2783 = vmatprep.subr.bf16.mxu0 0
    %2784 = vmatpush1.bf16.msra.mxu0 %v2636
    %2785 = vmatprep.subr.bf16.mxu0 0
    %2786 = vmatpush1.bf16.msra.mxu0 %v2637
    %2787 = vmatprep.subr.bf16.mxu0 0
    %2788 = vmatpush1.bf16.msra.mxu0 %v2638
    %2789 = vmatprep.subr.bf16.mxu0 0
    %2790 = vmatpush1.bf16.msra.mxu0 %v2639
    %2791 = vmatprep.subr.bf16.mxu0 0
    %2792 = vmatpush1.bf16.msra.mxu0 %v2640
    %2793 = vmatprep.subr.bf16.mxu0 0
    %2794 = vmatpush1.bf16.msra.mxu0 %v2641
    %2795 = vmatprep.subr.bf16.mxu0 0
    %2796 = vmatpush1.bf16.msra.mxu0 %v2642
    %2797 = vmatprep.subr.bf16.mxu0 0
    %2798 = vmatpush1.bf16.msra.mxu0 %v2643
    %2799 = vmatprep.subr.bf16.mxu0 0
    %2800 = vmatpush1.bf16.msra.mxu0 %v2644
    %2801 = vmatprep.subr.bf16.mxu0 0
    %2802 = vmatpush1.bf16.msra.mxu0 %v2645
    %2803 = vmatprep.subr.bf16.mxu0 0
    %2804 = vmatpush1.bf16.msra.mxu0 %v2646
    %2805 = vmatprep.subr.bf16.mxu0 0
    %2806 = vmatpush1.bf16.msra.mxu0 %v2647
    %2807 = vmatprep.subr.bf16.mxu0 0
    %2808 = vmatpush1.bf16.msra.mxu0 %v2648
    %2809 = vmatprep.subr.bf16.mxu0 0
    %2810 = vmatpush1.bf16.msra.mxu0 %v2649
    %2811 = vmatprep.subr.bf16.mxu0 0
    %2812 = vmatpush1.bf16.msra.mxu0 %v2650
    %2813 = vmatprep.mubr.bf16.mxu0 %v2307
    %2814 = vmatmul.mubr.bf16.gmra.mrb[0].mxu0 %v2306
    %v2815 = vpop.f32.mrb[0].mxu0
    %v2816 = vadd.f32 %v2775, %v2815
    %v2817 = vpop.f32.mrb[0].mxu0
    %v2818 = vpop.f32.mrb[0].mxu0
    %v2819 = vadd.f32 %v2778, %v2818
    %v2820 = vpop.f32.mrb[0].mxu0
    %2821 = vdwg.mxu0
    %v2822 = vmax.f32 %v2816, 0.0
    %v2823 = vmax.f32 %v2819, 0.0
    %v2824 = vpack.c.bf16 %v2823, %v2822
    %v2825 = vld [vmem:[#allocation12] sm:$0xf]
    %v2826 = vld [vmem:[#allocation12 + $0x4] sm:$0xf]
    %v2827 = vld [vmem:[#allocation12 + $0x8] sm:$0xf]
    %v2828 = vld [vmem:[#allocation12 + $0xc] sm:$0xf]
    %v2829 = vld [vmem:[#allocation12 + $0x10] sm:$0xf]
    %v2830 = vld [vmem:[#allocation12 + $0x14] sm:$0xf]
    %v2831 = vld [vmem:[#allocation12 + $0x18] sm:$0xf]
    %v2832 = vld [vmem:[#allocation12 + $0x1c] sm:$0xf]
    %v2833 = vld [vmem:[#allocation12 + $0x20] sm:$0xf]
    %v2834 = vld [vmem:[#allocation12 + $0x24] sm:$0xf]
    %v2835 = vld [vmem:[#allocation12 + $0x28] sm:$0xf]
    %v2836 = vld [vmem:[#allocation12 + $0x2c] sm:$0xf]
    %v2837 = vld [vmem:[#allocation12 + $0x30] sm:$0xf]
    %v2838 = vld [vmem:[#allocation12 + $0x34] sm:$0xf]
    %v2839 = vld [vmem:[#allocation12 + $0x38] sm:$0xf]
    %v2840 = vld [vmem:[#allocation12 + $0x3c] sm:$0xf]
    %s2841 = sld [smem:[#allocation2]]
    %v2842 = vstv %s2841
    %v2859 = vunpack.c.l.b16 %v2825
    %v2860 = vunpack.c.l.b16 %v2826
    %v2861 = vunpack.c.l.b16 %v2827
    %v2862 = vunpack.c.l.b16 %v2828
    %v2863 = vunpack.c.l.b16 %v2829
    %v2864 = vunpack.c.l.b16 %v2830
    %v2865 = vunpack.c.l.b16 %v2831
    %v2866 = vunpack.c.l.b16 %v2832
    %v2867 = vunpack.c.l.b16 %v2833
    %v2868 = vunpack.c.l.b16 %v2834
    %v2869 = vunpack.c.l.b16 %v2835
    %v2870 = vunpack.c.l.b16 %v2836
    %v2871 = vunpack.c.l.b16 %v2837
    %v2872 = vunpack.c.l.b16 %v2838
    %v2873 = vunpack.c.l.b16 %v2839
    %v2874 = vunpack.c.l.b16 %v2840
    %v2875 = vpack.c.b16 %v2860, %v2859
    %v2876 = vpack.c.b16 %v2862, %v2861
    %v2877 = vpack.c.b16 %v2864, %v2863
    %v2878 = vpack.c.b16 %v2866, %v2865
    %v2879 = vpack.c.b16 %v2868, %v2867
    %v2880 = vpack.c.b16 %v2870, %v2869
    %v2881 = vpack.c.b16 %v2872, %v2871
    %v2882 = vpack.c.b16 %v2874, %v2873
    %2891 = vmatprep.subr.bf16.mxu0 0
    %2892 = vmatpush1.bf16.msra.mxu0 %v2875
    %2893 = vmatprep.subr.bf16.mxu0 0
    %2894 = vmatpush1.bf16.msra.mxu0 %v2876
    %2895 = vmatprep.subr.bf16.mxu0 0
    %2896 = vmatpush1.bf16.msra.mxu0 %v2877
    %2897 = vmatprep.subr.bf16.mxu0 0
    %2898 = vmatpush1.bf16.msra.mxu0 %v2878
    %2899 = vmatprep.subr.bf16.mxu0 0
    %2900 = vmatpush1.bf16.msra.mxu0 %v2879
    %2901 = vmatprep.subr.bf16.mxu0 0
    %2902 = vmatpush1.bf16.msra.mxu0 %v2880
    %2903 = vmatprep.subr.bf16.mxu0 0
    %2904 = vmatpush1.bf16.msra.mxu0 %v2881
    %2905 = vmatprep.subr.bf16.mxu0 0
    %2906 = vmatpush1.bf16.msra.mxu0 %v2882
    %2907 = vmatprep.subr.bf16.mxu0 0
    %2908 = vmatpush1.bf16.msra.mxu0 0
    %2909 = vmatprep.subr.bf16.mxu0 0
    %2910 = vmatpush1.bf16.msra.mxu0 0
    %2911 = vmatprep.subr.bf16.mxu0 0
    %2912 = vmatpush1.bf16.msra.mxu0 0
    %2913 = vmatprep.subr.bf16.mxu0 0
    %2914 = vmatpush1.bf16.msra.mxu0 0
    %2915 = vmatprep.subr.bf16.mxu0 0
    %2916 = vmatpush1.bf16.msra.mxu0 0
    %2917 = vmatprep.subr.bf16.mxu0 0
    %2918 = vmatpush1.bf16.msra.mxu0 0
    %2919 = vmatprep.subr.bf16.mxu0 0
    %2920 = vmatpush1.bf16.msra.mxu0 0
    %2921 = vmatprep.subr.bf16.mxu0 0
    %2922 = vmatpush1.bf16.msra.mxu0 0
    %2923 = vmatprep.mubr.bf16.mxu0 0
    %2924 = vmatmul.mubr.bf16.gmra.mrb[0].mxu0 %v2824
    %v2925 = vpop.f32.mrb[0].mxu0
    %v2926 = vadd.f32 %v2842, %v2925
    %v2927 = vpop.f32.mrb[0].mxu0
    %v2928 = vpop.f32.mrb[0].mxu0
    %v2929 = vadd.f32 %v2842, %v2928
    %v2930 = vpop.f32.mrb[0].mxu0
    %2931 = vdwg.mxu0
    %v2932 = vxor.u32 %v2926, 2147483648
    %v2933 = vxor.u32 %v2929, 2147483648
    %v2934 = vmul.f32 %v2932, 1.442695
    %v2935 = vpow.pop %v2934
    %v2936 = vmul.f32 %v2933, 1.442695
    %v2937 = vpow.pop %v2936
    %v2938 = vadd.f32 %v2935, 1.0
    %v2939 = vadd.f32 %v2937, 1.0
    %v2940 = vrcp.pop %v2938
    %v2941 = vmul.f32 1.0, %v2940
    %v2942 = vrcp.pop %v2939
    %v2943 = vmul.f32 1.0, %v2942
    %2944 = vst [vmem:[#allocation14] sm:$0xff] %v2941
    %2945 = vst [vmem:[#allocation14 + $0x8] sm:$0xff] %v2943
    // Predicated region
    $region54: #{tpu_custom_call.1} parent=1 // pred_check
      _
    $region55: #{tpu_custom_call.1} parent=1 // pred_check_branch
      %2947 = sbr.rel (0) target = $region57
    $region56: #{tpu_custom_call.1} parent=1 // pred_region
      %s2949 = ssub.s32 256, 256
      %2950 = vsyncadd [#allocation5], %s2949
      %s2951 = sshll.u32 [#allocation14], 4
      %s2952 = int_to_ptr.vmem [resolvable:$true] %s2951
      %2957 = dma.vmem_to_hbm [thread:$0]  %s2952, 256, %s7, [#allocation5], 128, 128, 8
    $region57: #{tpu_custom_call.1} parent=1 // pred_fallthru
      _
    // Predicated region
    $region58: #{tpu_custom_call.1} parent=1 // pred_check
      _
    $region59: #{tpu_custom_call.1} parent=1 // pred_check_branch
      %2959 = sbr.rel (0) target = $region61
    $region60: #{tpu_custom_call.1} parent=1 // pred_region
      %2960 = dma.done [#allocation5], 256
    $region61: #{tpu_custom_call.1} parent=1 // pred_fallthru
      _
    %2961 = vsyncpa [#allocation4], 1
    %2962 = vsyncpa [#allocation7], 1
    %2963 = vsyncpa [#allocation10], 1
    %2964 = vsyncpa [#allocation13], 1
    %2965 = vsyncpa [#allocation5], 1

</llo_original>
